<compile_context>
chip_gen: v5e
topology: v5e:2x2
jax: 0.10.0
libtpu: 0.0.40
codegen_flags: <defaults>
</compile_context>

<pallas_src>
import functools

import jax
import jax.numpy as jnp
from jax.experimental import pallas as pl
from jax.experimental.pallas import tpu as pltpu


# -----------------------------------------------------------------------------
# Kernel: one voxel tile per grid step.
#   feat_ref : (tile_n, T, C)  point features of tile_n voxels
#   cnt_ref  : (tile_n, 1)     number of valid points per voxel (as float)
#   out_ref  : (tile_n, C)     per-voxel mean features
# -----------------------------------------------------------------------------
def _mean_vfe_kernel(feat_ref, cnt_ref, out_ref):
    sums = jnp.sum(feat_ref[...].astype(jnp.float32), axis=1)   # (tile_n, C)
    mean = sums / cnt_ref[...]                                   # broadcast (tile_n,1)
    out_ref[...] = mean.astype(out_ref.dtype)                    # single dense store


def _pick_tile_n(n, t, c, itemsize, vmem_budget_bytes=8 << 20):
    """Largest multiple-of-8 voxel tile whose feature block fits the budget
    (block is double-buffered by the Pallas pipeline, budget leaves headroom
    for the 32 MiB scoped limit even on v5e/v7x)."""
    bytes_per_voxel = max(1, t * c * itemsize)
    tile = (vmem_budget_bytes // bytes_per_voxel) // 8 * 8
    tile = max(8, min(tile, max(8, (n + 7) // 8 * 8)))
    return int(tile)


def mean_voxel_feature_extractor(features, num_voxels, *, tile_n=None):
    """features: (N, T, 3+C) float; num_voxels: (N,) int/float -> (N, 3+C)."""
    n, t, c = features.shape
    dtype = features.dtype

    if tile_n is None:
        tile_n = _pick_tile_n(n, t, c, jnp.dtype(dtype).itemsize)

    # Pad the voxel axis to a multiple of the tile; padded counts are 1 so the
    # (discarded) padded rows never divide by zero.
    n_pad = pl.cdiv(n, tile_n) * tile_n
    pad = n_pad - n
    feats_p = jnp.pad(features, ((0, pad), (0, 0), (0, 0)))
    cnt = num_voxels.astype(dtype).reshape(n, 1)                 # type_as(features)
    cnt_p = jnp.pad(cnt, ((0, pad), (0, 0)), constant_values=1)

    grid = (n_pad // tile_n,)

    out = pl.pallas_call(
        _mean_vfe_kernel,
        out_shape=jax.ShapeDtypeStruct((n_pad, c), dtype),
        grid_spec=pltpu.PrefetchScalarGridSpec(
            num_scalar_prefetch=0,
            grid=grid,
            in_specs=[
                pl.BlockSpec((tile_n, t, c), lambda i: (i, 0, 0)),
                pl.BlockSpec((tile_n, 1), lambda i: (i, 0)),
            ],
            out_specs=pl.BlockSpec((tile_n, c), lambda i: (i, 0)),
        ),
        compiler_params=pltpu.CompilerParams(
            dimension_semantics=("parallel",),          # shard tiles across TCs (v7x)
            vmem_limit_bytes=32 * 1024 * 1024,
        ),
    )(feats_p, cnt_p)

    return out[:n]


# -----------------------------------------------------------------------------
# Main: deterministic synthetic inputs, reference check.
# -----------------------------------------------------------------------------
if __name__ == "__main__":
    key = jax.random.PRNGKey(0)
    k_cnt, k_feat = jax.random.split(key)

    N = 64        # voxels
    T = 32        # max points per voxel
    C = 4         # 3 + C point features (x, y, z, intensity)

    num_voxels = jax.random.randint(k_cnt, (N,), 1, T + 1, dtype=jnp.int32)
    features = jax.random.normal(k_feat, (N, T, C), jnp.float32)
    # Zero out unused point slots (slot >= num_voxels), as the voxelizer does.
    slot = jnp.arange(T, dtype=jnp.int32)[None, :, None]
    features = jnp.where(slot < num_voxels[:, None, None], features, 0.0)

    out = mean_voxel_feature_extractor(features, num_voxels)
    out = jax.block_until_ready(out)

    ref = features.sum(axis=1) / num_voxels.astype(features.dtype)[:, None]
    assert out.shape == (N, C)
    assert bool(jnp.all(jnp.isfinite(out)))
    assert bool(jnp.allclose(out, ref, atol=1e-5, rtol=1e-5))
    print("KERNEL_OK")
</pallas_src>

<mosaic_0001>
module attributes {stable_mosaic.version = 11 : i64} {
  func.func @_mean_vfe_kernel(%arg0: i32, %arg1: memref<64x32x4xf32, #tpu.memory_space<vmem>>, %arg2: memref<64x1xf32, #tpu.memory_space<vmem>>, %arg3: memref<64x4xf32, #tpu.memory_space<vmem>>) attributes {dimension_semantics = [#tpu.dimension_semantics<parallel>], iteration_bounds = array<i64: 1>, scalar_prefetch = 0 : i64, scratch_operands = 0 : i64, tpu.core_type = #tpu.core_type<tc>, window_params = [{transform_indices = @transform_0, window_bounds = array<i64: 64, 32, 4>}, {transform_indices = @transform_1, window_bounds = array<i64: 64, 1>}, {transform_indices = @transform_2, window_bounds = array<i64: 64, 4>}]} {
    %c0 = arith.constant 0 : index
    %c0_0 = arith.constant 0 : index
    %c0_1 = arith.constant 0 : index
    %0 = vector.load %arg1[%c0, %c0_0, %c0_1] : memref<64x32x4xf32, #tpu.memory_space<vmem>>, vector<64x32x4xf32>
    %cst = arith.constant dense<0.000000e+00> : vector<64x4xf32>
    %1 = vector.multi_reduction <add>, %0, %cst [1] : vector<64x32x4xf32> to vector<64x4xf32>
    %c0_2 = arith.constant 0 : index
    %c0_3 = arith.constant 0 : index
    %2 = vector.load %arg2[%c0_2, %c0_3] : memref<64x1xf32, #tpu.memory_space<vmem>>, vector<64x1xf32>
    %3 = vector.broadcast %2 : vector<64x1xf32> to vector<64x4xf32>
    %4 = arith.divf %1, %3 : vector<64x4xf32>
    %c0_4 = arith.constant 0 : index
    %c0_5 = arith.constant 0 : index
    %5 = vector.load %arg3[%c0_4, %c0_5] : memref<64x4xf32, #tpu.memory_space<vmem>>, vector<64x4xf32>
    tpu.vector_store %arg3[%c0_4, %c0_5], %4 {strides = array<i32>} : memref<64x4xf32, #tpu.memory_space<vmem>>, vector<64x4xf32>,
    return
  }
  func.func @transform_0(%arg0: i32) -> (i32, i32, i32) {
    %c0_i32 = arith.constant 0 : i32
    %c0_i32_0 = arith.constant 0 : i32
    %c0_i32_1 = arith.constant 0 : i32
    return %arg0, %c0_i32, %c0_i32_0 : i32, i32, i32
  }
  func.func @transform_1(%arg0: i32) -> (i32, i32) {
    %c0_i32 = arith.constant 0 : i32
    %c0_i32_0 = arith.constant 0 : i32
    return %arg0, %c0_i32 : i32, i32
  }
  func.func @transform_2(%arg0: i32) -> (i32, i32) {
    %c0_i32 = arith.constant 0 : i32
    %c0_i32_0 = arith.constant 0 : i32
    return %arg0, %c0_i32 : i32, i32
  }
}

</mosaic_0001>

<llo_original>
// kernel: tpu_custom_call.1
$region0: #{tpu_custom_call.1}
  #allocation0 [shape = 'u32[]', space=smem, size = 0x4, offset = 0x4, fixed_abs, tag = 'smem constant byte address 0x4 - core index']
  #allocation1 [shape = 'u32[72,128]{1,0:T(1,128)}', space=vmem, size = 0x9000, scoped, tag = 'internal scratch']
  %s0 = inlined_call_operand.vmem [shape: f32[64,32,4], index: 0, kind: input, shape index: {}]
  %s1 = inlined_call_operand.vmem [shape: f32[64,1], index: 1, kind: input, shape index: {}]
  %s2 = inlined_call_operand.vmem [shape: f32[64,4], index: 2, kind: output, shape index: {}]
  %s3 = sld [smem:[#allocation0]]
  $region18: #{tpu_custom_call.1} parent=0
    _
  %s5 = ssub.s32 1, %s3
  %s6 = scalar_select 0, %s5, %s3
  // Predicated region
  $region2: #{tpu_custom_call.1} parent=0 // pred_check
    _
  $region3: #{tpu_custom_call.1} parent=0 // pred_check_branch
    %8 = sbr.rel (0) target = $region5
  $region4: #{tpu_custom_call.1} parent=0 // pred_region
    _
  $region5: #{tpu_custom_call.1} parent=0 // pred_fallthru
    _
  // Predicated region
  $region6: #{tpu_custom_call.1} parent=0 // pred_check
    _
  $region7: #{tpu_custom_call.1} parent=0 // pred_check_branch
    %10 = sbr.rel (0) target = $region9
  $region8: #{tpu_custom_call.1} parent=0 // pred_region
    _
  $region9: #{tpu_custom_call.1} parent=0 // pred_fallthru
    _
  %v11 = vld [vmem:[%s0] sm:$0xff]
  %v12 = vld [vmem:[%s0 + $0x8] sm:$0xff]
  %v13 = vld [vmem:[%s0 + $0x10] sm:$0xff]
  %v14 = vld [vmem:[%s0 + $0x18] sm:$0xff]
  %v15 = vld [vmem:[%s0 + $0x20] sm:$0xff]
  %v16 = vld [vmem:[%s0 + $0x28] sm:$0xff]
  %v17 = vld [vmem:[%s0 + $0x30] sm:$0xff]
  %v18 = vld [vmem:[%s0 + $0x38] sm:$0xff]
  %v19 = vld [vmem:[%s0 + $0x40] sm:$0xff]
  %v20 = vld [vmem:[%s0 + $0x48] sm:$0xff]
  %v21 = vld [vmem:[%s0 + $0x50] sm:$0xff]
  %v22 = vld [vmem:[%s0 + $0x58] sm:$0xff]
  %v23 = vld [vmem:[%s0 + $0x60] sm:$0xff]
  %v24 = vld [vmem:[%s0 + $0x68] sm:$0xff]
  %v25 = vld [vmem:[%s0 + $0x70] sm:$0xff]
  %v26 = vld [vmem:[%s0 + $0x78] sm:$0xff]
  %v27 = vld [vmem:[%s0 + $0x80] sm:$0xff]
  %v28 = vld [vmem:[%s0 + $0x88] sm:$0xff]
  %v29 = vld [vmem:[%s0 + $0x90] sm:$0xff]
  %v30 = vld [vmem:[%s0 + $0x98] sm:$0xff]
  %v31 = vld [vmem:[%s0 + $0xa0] sm:$0xff]
  %v32 = vld [vmem:[%s0 + $0xa8] sm:$0xff]
  %v33 = vld [vmem:[%s0 + $0xb0] sm:$0xff]
  %v34 = vld [vmem:[%s0 + $0xb8] sm:$0xff]
  %v35 = vld [vmem:[%s0 + $0xc0] sm:$0xff]
  %v36 = vld [vmem:[%s0 + $0xc8] sm:$0xff]
  %v37 = vld [vmem:[%s0 + $0xd0] sm:$0xff]
  %v38 = vld [vmem:[%s0 + $0xd8] sm:$0xff]
  %v39 = vld [vmem:[%s0 + $0xe0] sm:$0xff]
  %v40 = vld [vmem:[%s0 + $0xe8] sm:$0xff]
  %v41 = vld [vmem:[%s0 + $0xf0] sm:$0xff]
  %v42 = vld [vmem:[%s0 + $0xf8] sm:$0xff]
  %v43 = vld [vmem:[%s0 + $0x100] sm:$0xff]
  %v44 = vld [vmem:[%s0 + $0x108] sm:$0xff]
  %v45 = vld [vmem:[%s0 + $0x110] sm:$0xff]
  %v46 = vld [vmem:[%s0 + $0x118] sm:$0xff]
  %v47 = vld [vmem:[%s0 + $0x120] sm:$0xff]
  %v48 = vld [vmem:[%s0 + $0x128] sm:$0xff]
  %v49 = vld [vmem:[%s0 + $0x130] sm:$0xff]
  %v50 = vld [vmem:[%s0 + $0x138] sm:$0xff]
  %v51 = vld [vmem:[%s0 + $0x140] sm:$0xff]
  %v52 = vld [vmem:[%s0 + $0x148] sm:$0xff]
  %v53 = vld [vmem:[%s0 + $0x150] sm:$0xff]
  %v54 = vld [vmem:[%s0 + $0x158] sm:$0xff]
  %v55 = vld [vmem:[%s0 + $0x160] sm:$0xff]
  %v56 = vld [vmem:[%s0 + $0x168] sm:$0xff]
  %v57 = vld [vmem:[%s0 + $0x170] sm:$0xff]
  %v58 = vld [vmem:[%s0 + $0x178] sm:$0xff]
  %v59 = vld [vmem:[%s0 + $0x180] sm:$0xff]
  %v60 = vld [vmem:[%s0 + $0x188] sm:$0xff]
  %v61 = vld [vmem:[%s0 + $0x190] sm:$0xff]
  %v62 = vld [vmem:[%s0 + $0x198] sm:$0xff]
  %v63 = vld [vmem:[%s0 + $0x1a0] sm:$0xff]
  %v64 = vld [vmem:[%s0 + $0x1a8] sm:$0xff]
  %v65 = vld [vmem:[%s0 + $0x1b0] sm:$0xff]
  %v66 = vld [vmem:[%s0 + $0x1b8] sm:$0xff]
  %v67 = vld [vmem:[%s0 + $0x1c0] sm:$0xff]
  %v68 = vld [vmem:[%s0 + $0x1c8] sm:$0xff]
  %v69 = vld [vmem:[%s0 + $0x1d0] sm:$0xff]
  %v70 = vld [vmem:[%s0 + $0x1d8] sm:$0xff]
  %v71 = vld [vmem:[%s0 + $0x1e0] sm:$0xff]
  %v72 = vld [vmem:[%s0 + $0x1e8] sm:$0xff]
  %v73 = vld [vmem:[%s0 + $0x1f0] sm:$0xff]
  %v74 = vld [vmem:[%s0 + $0x1f8] sm:$0xff]
  %v75 = vld [vmem:[%s0 + $0x200] sm:$0xff]
  %v76 = vld [vmem:[%s0 + $0x208] sm:$0xff]
  %v77 = vld [vmem:[%s0 + $0x210] sm:$0xff]
  %v78 = vld [vmem:[%s0 + $0x218] sm:$0xff]
  %v79 = vld [vmem:[%s0 + $0x220] sm:$0xff]
  %v80 = vld [vmem:[%s0 + $0x228] sm:$0xff]
  %v81 = vld [vmem:[%s0 + $0x230] sm:$0xff]
  %v82 = vld [vmem:[%s0 + $0x238] sm:$0xff]
  %v83 = vld [vmem:[%s0 + $0x240] sm:$0xff]
  %v84 = vld [vmem:[%s0 + $0x248] sm:$0xff]
  %v85 = vld [vmem:[%s0 + $0x250] sm:$0xff]
  %v86 = vld [vmem:[%s0 + $0x258] sm:$0xff]
  %v87 = vld [vmem:[%s0 + $0x260] sm:$0xff]
  %v88 = vld [vmem:[%s0 + $0x268] sm:$0xff]
  %v89 = vld [vmem:[%s0 + $0x270] sm:$0xff]
  %v90 = vld [vmem:[%s0 + $0x278] sm:$0xff]
  %v91 = vld [vmem:[%s0 + $0x280] sm:$0xff]
  %v92 = vld [vmem:[%s0 + $0x288] sm:$0xff]
  %v93 = vld [vmem:[%s0 + $0x290] sm:$0xff]
  %v94 = vld [vmem:[%s0 + $0x298] sm:$0xff]
  %v95 = vld [vmem:[%s0 + $0x2a0] sm:$0xff]
  %v96 = vld [vmem:[%s0 + $0x2a8] sm:$0xff]
  %v97 = vld [vmem:[%s0 + $0x2b0] sm:$0xff]
  %v98 = vld [vmem:[%s0 + $0x2b8] sm:$0xff]
  %v99 = vld [vmem:[%s0 + $0x2c0] sm:$0xff]
  %v100 = vld [vmem:[%s0 + $0x2c8] sm:$0xff]
  %v101 = vld [vmem:[%s0 + $0x2d0] sm:$0xff]
  %v102 = vld [vmem:[%s0 + $0x2d8] sm:$0xff]
  %v103 = vld [vmem:[%s0 + $0x2e0] sm:$0xff]
  %v104 = vld [vmem:[%s0 + $0x2e8] sm:$0xff]
  %v105 = vld [vmem:[%s0 + $0x2f0] sm:$0xff]
  %v106 = vld [vmem:[%s0 + $0x2f8] sm:$0xff]
  %v107 = vld [vmem:[%s0 + $0x300] sm:$0xff]
  %v108 = vld [vmem:[%s0 + $0x308] sm:$0xff]
  %v109 = vld [vmem:[%s0 + $0x310] sm:$0xff]
  %v110 = vld [vmem:[%s0 + $0x318] sm:$0xff]
  %v111 = vld [vmem:[%s0 + $0x320] sm:$0xff]
  %v112 = vld [vmem:[%s0 + $0x328] sm:$0xff]
  %v113 = vld [vmem:[%s0 + $0x330] sm:$0xff]
  %v114 = vld [vmem:[%s0 + $0x338] sm:$0xff]
  %v115 = vld [vmem:[%s0 + $0x340] sm:$0xff]
  %v116 = vld [vmem:[%s0 + $0x348] sm:$0xff]
  %v117 = vld [vmem:[%s0 + $0x350] sm:$0xff]
  %v118 = vld [vmem:[%s0 + $0x358] sm:$0xff]
  %v119 = vld [vmem:[%s0 + $0x360] sm:$0xff]
  %v120 = vld [vmem:[%s0 + $0x368] sm:$0xff]
  %v121 = vld [vmem:[%s0 + $0x370] sm:$0xff]
  %v122 = vld [vmem:[%s0 + $0x378] sm:$0xff]
  %v123 = vld [vmem:[%s0 + $0x380] sm:$0xff]
  %v124 = vld [vmem:[%s0 + $0x388] sm:$0xff]
  %v125 = vld [vmem:[%s0 + $0x390] sm:$0xff]
  %v126 = vld [vmem:[%s0 + $0x398] sm:$0xff]
  %v127 = vld [vmem:[%s0 + $0x3a0] sm:$0xff]
  %v128 = vld [vmem:[%s0 + $0x3a8] sm:$0xff]
  %v129 = vld [vmem:[%s0 + $0x3b0] sm:$0xff]
  %v130 = vld [vmem:[%s0 + $0x3b8] sm:$0xff]
  %v131 = vld [vmem:[%s0 + $0x3c0] sm:$0xff]
  %v132 = vld [vmem:[%s0 + $0x3c8] sm:$0xff]
  %v133 = vld [vmem:[%s0 + $0x3d0] sm:$0xff]
  %v134 = vld [vmem:[%s0 + $0x3d8] sm:$0xff]
  %v135 = vld [vmem:[%s0 + $0x3e0] sm:$0xff]
  %v136 = vld [vmem:[%s0 + $0x3e8] sm:$0xff]
  %v137 = vld [vmem:[%s0 + $0x3f0] sm:$0xff]
  %v138 = vld [vmem:[%s0 + $0x3f8] sm:$0xff]
  %v139 = vld [vmem:[%s0 + $0x400] sm:$0xff]
  %v140 = vld [vmem:[%s0 + $0x408] sm:$0xff]
  %v141 = vld [vmem:[%s0 + $0x410] sm:$0xff]
  %v142 = vld [vmem:[%s0 + $0x418] sm:$0xff]
  %v143 = vld [vmem:[%s0 + $0x420] sm:$0xff]
  %v144 = vld [vmem:[%s0 + $0x428] sm:$0xff]
  %v145 = vld [vmem:[%s0 + $0x430] sm:$0xff]
  %v146 = vld [vmem:[%s0 + $0x438] sm:$0xff]
  %v147 = vld [vmem:[%s0 + $0x440] sm:$0xff]
  %v148 = vld [vmem:[%s0 + $0x448] sm:$0xff]
  %v149 = vld [vmem:[%s0 + $0x450] sm:$0xff]
  %v150 = vld [vmem:[%s0 + $0x458] sm:$0xff]
  %v151 = vld [vmem:[%s0 + $0x460] sm:$0xff]
  %v152 = vld [vmem:[%s0 + $0x468] sm:$0xff]
  %v153 = vld [vmem:[%s0 + $0x470] sm:$0xff]
  %v154 = vld [vmem:[%s0 + $0x478] sm:$0xff]
  %v155 = vld [vmem:[%s0 + $0x480] sm:$0xff]
  %v156 = vld [vmem:[%s0 + $0x488] sm:$0xff]
  %v157 = vld [vmem:[%s0 + $0x490] sm:$0xff]
  %v158 = vld [vmem:[%s0 + $0x498] sm:$0xff]
  %v159 = vld [vmem:[%s0 + $0x4a0] sm:$0xff]
  %v160 = vld [vmem:[%s0 + $0x4a8] sm:$0xff]
  %v161 = vld [vmem:[%s0 + $0x4b0] sm:$0xff]
  %v162 = vld [vmem:[%s0 + $0x4b8] sm:$0xff]
  %v163 = vld [vmem:[%s0 + $0x4c0] sm:$0xff]
  %v164 = vld [vmem:[%s0 + $0x4c8] sm:$0xff]
  %v165 = vld [vmem:[%s0 + $0x4d0] sm:$0xff]
  %v166 = vld [vmem:[%s0 + $0x4d8] sm:$0xff]
  %v167 = vld [vmem:[%s0 + $0x4e0] sm:$0xff]
  %v168 = vld [vmem:[%s0 + $0x4e8] sm:$0xff]
  %v169 = vld [vmem:[%s0 + $0x4f0] sm:$0xff]
  %v170 = vld [vmem:[%s0 + $0x4f8] sm:$0xff]
  %v171 = vld [vmem:[%s0 + $0x500] sm:$0xff]
  %v172 = vld [vmem:[%s0 + $0x508] sm:$0xff]
  %v173 = vld [vmem:[%s0 + $0x510] sm:$0xff]
  %v174 = vld [vmem:[%s0 + $0x518] sm:$0xff]
  %v175 = vld [vmem:[%s0 + $0x520] sm:$0xff]
  %v176 = vld [vmem:[%s0 + $0x528] sm:$0xff]
  %v177 = vld [vmem:[%s0 + $0x530] sm:$0xff]
  %v178 = vld [vmem:[%s0 + $0x538] sm:$0xff]
  %v179 = vld [vmem:[%s0 + $0x540] sm:$0xff]
  %v180 = vld [vmem:[%s0 + $0x548] sm:$0xff]
  %v181 = vld [vmem:[%s0 + $0x550] sm:$0xff]
  %v182 = vld [vmem:[%s0 + $0x558] sm:$0xff]
  %v183 = vld [vmem:[%s0 + $0x560] sm:$0xff]
  %v184 = vld [vmem:[%s0 + $0x568] sm:$0xff]
  %v185 = vld [vmem:[%s0 + $0x570] sm:$0xff]
  %v186 = vld [vmem:[%s0 + $0x578] sm:$0xff]
  %v187 = vld [vmem:[%s0 + $0x580] sm:$0xff]
  %v188 = vld [vmem:[%s0 + $0x588] sm:$0xff]
  %v189 = vld [vmem:[%s0 + $0x590] sm:$0xff]
  %v190 = vld [vmem:[%s0 + $0x598] sm:$0xff]
  %v191 = vld [vmem:[%s0 + $0x5a0] sm:$0xff]
  %v192 = vld [vmem:[%s0 + $0x5a8] sm:$0xff]
  %v193 = vld [vmem:[%s0 + $0x5b0] sm:$0xff]
  %v194 = vld [vmem:[%s0 + $0x5b8] sm:$0xff]
  %v195 = vld [vmem:[%s0 + $0x5c0] sm:$0xff]
  %v196 = vld [vmem:[%s0 + $0x5c8] sm:$0xff]
  %v197 = vld [vmem:[%s0 + $0x5d0] sm:$0xff]
  %v198 = vld [vmem:[%s0 + $0x5d8] sm:$0xff]
  %v199 = vld [vmem:[%s0 + $0x5e0] sm:$0xff]
  %v200 = vld [vmem:[%s0 + $0x5e8] sm:$0xff]
  %v201 = vld [vmem:[%s0 + $0x5f0] sm:$0xff]
  %v202 = vld [vmem:[%s0 + $0x5f8] sm:$0xff]
  %v203 = vld [vmem:[%s0 + $0x600] sm:$0xff]
  %v204 = vld [vmem:[%s0 + $0x608] sm:$0xff]
  %v205 = vld [vmem:[%s0 + $0x610] sm:$0xff]
  %v206 = vld [vmem:[%s0 + $0x618] sm:$0xff]
  %v207 = vld [vmem:[%s0 + $0x620] sm:$0xff]
  %v208 = vld [vmem:[%s0 + $0x628] sm:$0xff]
  %v209 = vld [vmem:[%s0 + $0x630] sm:$0xff]
  %v210 = vld [vmem:[%s0 + $0x638] sm:$0xff]
  %v211 = vld [vmem:[%s0 + $0x640] sm:$0xff]
  %v212 = vld [vmem:[%s0 + $0x648] sm:$0xff]
  %v213 = vld [vmem:[%s0 + $0x650] sm:$0xff]
  %v214 = vld [vmem:[%s0 + $0x658] sm:$0xff]
  %v215 = vld [vmem:[%s0 + $0x660] sm:$0xff]
  %v216 = vld [vmem:[%s0 + $0x668] sm:$0xff]
  %v217 = vld [vmem:[%s0 + $0x670] sm:$0xff]
  %v218 = vld [vmem:[%s0 + $0x678] sm:$0xff]
  %v219 = vld [vmem:[%s0 + $0x680] sm:$0xff]
  %v220 = vld [vmem:[%s0 + $0x688] sm:$0xff]
  %v221 = vld [vmem:[%s0 + $0x690] sm:$0xff]
  %v222 = vld [vmem:[%s0 + $0x698] sm:$0xff]
  %v223 = vld [vmem:[%s0 + $0x6a0] sm:$0xff]
  %v224 = vld [vmem:[%s0 + $0x6a8] sm:$0xff]
  %v225 = vld [vmem:[%s0 + $0x6b0] sm:$0xff]
  %v226 = vld [vmem:[%s0 + $0x6b8] sm:$0xff]
  %v227 = vld [vmem:[%s0 + $0x6c0] sm:$0xff]
  %v228 = vld [vmem:[%s0 + $0x6c8] sm:$0xff]
  %v229 = vld [vmem:[%s0 + $0x6d0] sm:$0xff]
  %v230 = vld [vmem:[%s0 + $0x6d8] sm:$0xff]
  %v231 = vld [vmem:[%s0 + $0x6e0] sm:$0xff]
  %v232 = vld [vmem:[%s0 + $0x6e8] sm:$0xff]
  %v233 = vld [vmem:[%s0 + $0x6f0] sm:$0xff]
  %v234 = vld [vmem:[%s0 + $0x6f8] sm:$0xff]
  %v235 = vld [vmem:[%s0 + $0x700] sm:$0xff]
  %v236 = vld [vmem:[%s0 + $0x708] sm:$0xff]
  %v237 = vld [vmem:[%s0 + $0x710] sm:$0xff]
  %v238 = vld [vmem:[%s0 + $0x718] sm:$0xff]
  %v239 = vld [vmem:[%s0 + $0x720] sm:$0xff]
  %v240 = vld [vmem:[%s0 + $0x728] sm:$0xff]
  %v241 = vld [vmem:[%s0 + $0x730] sm:$0xff]
  %v242 = vld [vmem:[%s0 + $0x738] sm:$0xff]
  %v243 = vld [vmem:[%s0 + $0x740] sm:$0xff]
  %v244 = vld [vmem:[%s0 + $0x748] sm:$0xff]
  %v245 = vld [vmem:[%s0 + $0x750] sm:$0xff]
  %v246 = vld [vmem:[%s0 + $0x758] sm:$0xff]
  %v247 = vld [vmem:[%s0 + $0x760] sm:$0xff]
  %v248 = vld [vmem:[%s0 + $0x768] sm:$0xff]
  %v249 = vld [vmem:[%s0 + $0x770] sm:$0xff]
  %v250 = vld [vmem:[%s0 + $0x778] sm:$0xff]
  %v251 = vld [vmem:[%s0 + $0x780] sm:$0xff]
  %v252 = vld [vmem:[%s0 + $0x788] sm:$0xff]
  %v253 = vld [vmem:[%s0 + $0x790] sm:$0xff]
  %v254 = vld [vmem:[%s0 + $0x798] sm:$0xff]
  %v255 = vld [vmem:[%s0 + $0x7a0] sm:$0xff]
  %v256 = vld [vmem:[%s0 + $0x7a8] sm:$0xff]
  %v257 = vld [vmem:[%s0 + $0x7b0] sm:$0xff]
  %v258 = vld [vmem:[%s0 + $0x7b8] sm:$0xff]
  %v259 = vld [vmem:[%s0 + $0x7c0] sm:$0xff]
  %v260 = vld [vmem:[%s0 + $0x7c8] sm:$0xff]
  %v261 = vld [vmem:[%s0 + $0x7d0] sm:$0xff]
  %v262 = vld [vmem:[%s0 + $0x7d8] sm:$0xff]
  %v263 = vld [vmem:[%s0 + $0x7e0] sm:$0xff]
  %v264 = vld [vmem:[%s0 + $0x7e8] sm:$0xff]
  %v265 = vld [vmem:[%s0 + $0x7f0] sm:$0xff]
  %v266 = vld [vmem:[%s0 + $0x7f8] sm:$0xff]
  %vm267 = vcmask 31744
  %v268 = vsel %vm267, %v11, 0.0
  %v269 = vsel %vm267, %v12, 0.0
  %v270 = vadd.f32 %v268, %v269
  %v271 = vsel %vm267, %v13, 0.0
  %v272 = vadd.f32 %v270, %v271
  %v273 = vsel %vm267, %v14, 0.0
  %v274 = vadd.f32 %v272, %v273
  %v275 = vrot.slane %v274, 4
  %v276 = vadd.f32 %v274, %v275
  %v277 = vrot.slane %v276, 2
  %v278 = vadd.f32 %v276, %v277
  %v279 = vrot.slane %v278, 1
  %v280 = vadd.f32 %v278, %v279
  %v281 = vsel %vm267, %v15, 0.0
  %v282 = vsel %vm267, %v16, 0.0
  %v283 = vadd.f32 %v281, %v282
  %v284 = vsel %vm267, %v17, 0.0
  %v285 = vadd.f32 %v283, %v284
  %v286 = vsel %vm267, %v18, 0.0
  %v287 = vadd.f32 %v285, %v286
  %v288 = vrot.slane %v287, 4
  %v289 = vadd.f32 %v287, %v288
  %v290 = vrot.slane %v289, 2
  %v291 = vadd.f32 %v289, %v290
  %v292 = vrot.slane %v291, 1
  %v293 = vadd.f32 %v291, %v292
  %v294 = vsel %vm267, %v19, 0.0
  %v295 = vsel %vm267, %v20, 0.0
  %v296 = vadd.f32 %v294, %v295
  %v297 = vsel %vm267, %v21, 0.0
  %v298 = vadd.f32 %v296, %v297
  %v299 = vsel %vm267, %v22, 0.0
  %v300 = vadd.f32 %v298, %v299
  %v301 = vrot.slane %v300, 4
  %v302 = vadd.f32 %v300, %v301
  %v303 = vrot.slane %v302, 2
  %v304 = vadd.f32 %v302, %v303
  %v305 = vrot.slane %v304, 1
  %v306 = vadd.f32 %v304, %v305
  %v307 = vsel %vm267, %v23, 0.0
  %v308 = vsel %vm267, %v24, 0.0
  %v309 = vadd.f32 %v307, %v308
  %v310 = vsel %vm267, %v25, 0.0
  %v311 = vadd.f32 %v309, %v310
  %v312 = vsel %vm267, %v26, 0.0
  %v313 = vadd.f32 %v311, %v312
  %v314 = vrot.slane %v313, 4
  %v315 = vadd.f32 %v313, %v314
  %v316 = vrot.slane %v315, 2
  %v317 = vadd.f32 %v315, %v316
  %v318 = vrot.slane %v317, 1
  %v319 = vadd.f32 %v317, %v318
  %v320 = vsel %vm267, %v27, 0.0
  %v321 = vsel %vm267, %v28, 0.0
  %v322 = vadd.f32 %v320, %v321
  %v323 = vsel %vm267, %v29, 0.0
  %v324 = vadd.f32 %v322, %v323
  %v325 = vsel %vm267, %v30, 0.0
  %v326 = vadd.f32 %v324, %v325
  %v327 = vrot.slane %v326, 4
  %v328 = vadd.f32 %v326, %v327
  %v329 = vrot.slane %v328, 2
  %v330 = vadd.f32 %v328, %v329
  %v331 = vrot.slane %v330, 1
  %v332 = vadd.f32 %v330, %v331
  %v333 = vsel %vm267, %v31, 0.0
  %v334 = vsel %vm267, %v32, 0.0
  %v335 = vadd.f32 %v333, %v334
  %v336 = vsel %vm267, %v33, 0.0
  %v337 = vadd.f32 %v335, %v336
  %v338 = vsel %vm267, %v34, 0.0
  %v339 = vadd.f32 %v337, %v338
  %v340 = vrot.slane %v339, 4
  %v341 = vadd.f32 %v339, %v340
  %v342 = vrot.slane %v341, 2
  %v343 = vadd.f32 %v341, %v342
  %v344 = vrot.slane %v343, 1
  %v345 = vadd.f32 %v343, %v344
  %v346 = vsel %vm267, %v35, 0.0
  %v347 = vsel %vm267, %v36, 0.0
  %v348 = vadd.f32 %v346, %v347
  %v349 = vsel %vm267, %v37, 0.0
  %v350 = vadd.f32 %v348, %v349
  %v351 = vsel %vm267, %v38, 0.0
  %v352 = vadd.f32 %v350, %v351
  %v353 = vrot.slane %v352, 4
  %v354 = vadd.f32 %v352, %v353
  %v355 = vrot.slane %v354, 2
  %v356 = vadd.f32 %v354, %v355
  %v357 = vrot.slane %v356, 1
  %v358 = vadd.f32 %v356, %v357
  %v359 = vsel %vm267, %v39, 0.0
  %v360 = vsel %vm267, %v40, 0.0
  %v361 = vadd.f32 %v359, %v360
  %v362 = vsel %vm267, %v41, 0.0
  %v363 = vadd.f32 %v361, %v362
  %v364 = vsel %vm267, %v42, 0.0
  %v365 = vadd.f32 %v363, %v364
  %v366 = vrot.slane %v365, 4
  %v367 = vadd.f32 %v365, %v366
  %v368 = vrot.slane %v367, 2
  %v369 = vadd.f32 %v367, %v368
  %v370 = vrot.slane %v369, 1
  %v371 = vadd.f32 %v369, %v370
  %v372 = vsel %vm267, %v43, 0.0
  %v373 = vsel %vm267, %v44, 0.0
  %v374 = vadd.f32 %v372, %v373
  %v375 = vsel %vm267, %v45, 0.0
  %v376 = vadd.f32 %v374, %v375
  %v377 = vsel %vm267, %v46, 0.0
  %v378 = vadd.f32 %v376, %v377
  %v379 = vrot.slane %v378, 4
  %v380 = vadd.f32 %v378, %v379
  %v381 = vrot.slane %v380, 2
  %v382 = vadd.f32 %v380, %v381
  %v383 = vrot.slane %v382, 1
  %v384 = vadd.f32 %v382, %v383
  %v385 = vsel %vm267, %v47, 0.0
  %v386 = vsel %vm267, %v48, 0.0
  %v387 = vadd.f32 %v385, %v386
  %v388 = vsel %vm267, %v49, 0.0
  %v389 = vadd.f32 %v387, %v388
  %v390 = vsel %vm267, %v50, 0.0
  %v391 = vadd.f32 %v389, %v390
  %v392 = vrot.slane %v391, 4
  %v393 = vadd.f32 %v391, %v392
  %v394 = vrot.slane %v393, 2
  %v395 = vadd.f32 %v393, %v394
  %v396 = vrot.slane %v395, 1
  %v397 = vadd.f32 %v395, %v396
  %v398 = vsel %vm267, %v51, 0.0
  %v399 = vsel %vm267, %v52, 0.0
  %v400 = vadd.f32 %v398, %v399
  %v401 = vsel %vm267, %v53, 0.0
  %v402 = vadd.f32 %v400, %v401
  %v403 = vsel %vm267, %v54, 0.0
  %v404 = vadd.f32 %v402, %v403
  %v405 = vrot.slane %v404, 4
  %v406 = vadd.f32 %v404, %v405
  %v407 = vrot.slane %v406, 2
  %v408 = vadd.f32 %v406, %v407
  %v409 = vrot.slane %v408, 1
  %v410 = vadd.f32 %v408, %v409
  %v411 = vsel %vm267, %v55, 0.0
  %v412 = vsel %vm267, %v56, 0.0
  %v413 = vadd.f32 %v411, %v412
  %v414 = vsel %vm267, %v57, 0.0
  %v415 = vadd.f32 %v413, %v414
  %v416 = vsel %vm267, %v58, 0.0
  %v417 = vadd.f32 %v415, %v416
  %v418 = vrot.slane %v417, 4
  %v419 = vadd.f32 %v417, %v418
  %v420 = vrot.slane %v419, 2
  %v421 = vadd.f32 %v419, %v420
  %v422 = vrot.slane %v421, 1
  %v423 = vadd.f32 %v421, %v422
  %v424 = vsel %vm267, %v59, 0.0
  %v425 = vsel %vm267, %v60, 0.0
  %v426 = vadd.f32 %v424, %v425
  %v427 = vsel %vm267, %v61, 0.0
  %v428 = vadd.f32 %v426, %v427
  %v429 = vsel %vm267, %v62, 0.0
  %v430 = vadd.f32 %v428, %v429
  %v431 = vrot.slane %v430, 4
  %v432 = vadd.f32 %v430, %v431
  %v433 = vrot.slane %v432, 2
  %v434 = vadd.f32 %v432, %v433
  %v435 = vrot.slane %v434, 1
  %v436 = vadd.f32 %v434, %v435
  %v437 = vsel %vm267, %v63, 0.0
  %v438 = vsel %vm267, %v64, 0.0
  %v439 = vadd.f32 %v437, %v438
  %v440 = vsel %vm267, %v65, 0.0
  %v441 = vadd.f32 %v439, %v440
  %v442 = vsel %vm267, %v66, 0.0
  %v443 = vadd.f32 %v441, %v442
  %v444 = vrot.slane %v443, 4
  %v445 = vadd.f32 %v443, %v444
  %v446 = vrot.slane %v445, 2
  %v447 = vadd.f32 %v445, %v446
  %v448 = vrot.slane %v447, 1
  %v449 = vadd.f32 %v447, %v448
  %v450 = vsel %vm267, %v67, 0.0
  %v451 = vsel %vm267, %v68, 0.0
  %v452 = vadd.f32 %v450, %v451
  %v453 = vsel %vm267, %v69, 0.0
  %v454 = vadd.f32 %v452, %v453
  %v455 = vsel %vm267, %v70, 0.0
  %v456 = vadd.f32 %v454, %v455
  %v457 = vrot.slane %v456, 4
  %v458 = vadd.f32 %v456, %v457
  %v459 = vrot.slane %v458, 2
  %v460 = vadd.f32 %v458, %v459
  %v461 = vrot.slane %v460, 1
  %v462 = vadd.f32 %v460, %v461
  %v463 = vsel %vm267, %v71, 0.0
  %v464 = vsel %vm267, %v72, 0.0
  %v465 = vadd.f32 %v463, %v464
  %v466 = vsel %vm267, %v73, 0.0
  %v467 = vadd.f32 %v465, %v466
  %v468 = vsel %vm267, %v74, 0.0
  %v469 = vadd.f32 %v467, %v468
  %v470 = vrot.slane %v469, 4
  %v471 = vadd.f32 %v469, %v470
  %v472 = vrot.slane %v471, 2
  %v473 = vadd.f32 %v471, %v472
  %v474 = vrot.slane %v473, 1
  %v475 = vadd.f32 %v473, %v474
  %v476 = vsel %vm267, %v75, 0.0
  %v477 = vsel %vm267, %v76, 0.0
  %v478 = vadd.f32 %v476, %v477
  %v479 = vsel %vm267, %v77, 0.0
  %v480 = vadd.f32 %v478, %v479
  %v481 = vsel %vm267, %v78, 0.0
  %v482 = vadd.f32 %v480, %v481
  %v483 = vrot.slane %v482, 4
  %v484 = vadd.f32 %v482, %v483
  %v485 = vrot.slane %v484, 2
  %v486 = vadd.f32 %v484, %v485
  %v487 = vrot.slane %v486, 1
  %v488 = vadd.f32 %v486, %v487
  %v489 = vsel %vm267, %v79, 0.0
  %v490 = vsel %vm267, %v80, 0.0
  %v491 = vadd.f32 %v489, %v490
  %v492 = vsel %vm267, %v81, 0.0
  %v493 = vadd.f32 %v491, %v492
  %v494 = vsel %vm267, %v82, 0.0
  %v495 = vadd.f32 %v493, %v494
  %v496 = vrot.slane %v495, 4
  %v497 = vadd.f32 %v495, %v496
  %v498 = vrot.slane %v497, 2
  %v499 = vadd.f32 %v497, %v498
  %v500 = vrot.slane %v499, 1
  %v501 = vadd.f32 %v499, %v500
  %v502 = vsel %vm267, %v83, 0.0
  %v503 = vsel %vm267, %v84, 0.0
  %v504 = vadd.f32 %v502, %v503
  %v505 = vsel %vm267, %v85, 0.0
  %v506 = vadd.f32 %v504, %v505
  %v507 = vsel %vm267, %v86, 0.0
  %v508 = vadd.f32 %v506, %v507
  %v509 = vrot.slane %v508, 4
  %v510 = vadd.f32 %v508, %v509
  %v511 = vrot.slane %v510, 2
  %v512 = vadd.f32 %v510, %v511
  %v513 = vrot.slane %v512, 1
  %v514 = vadd.f32 %v512, %v513
  %v515 = vsel %vm267, %v87, 0.0
  %v516 = vsel %vm267, %v88, 0.0
  %v517 = vadd.f32 %v515, %v516
  %v518 = vsel %vm267, %v89, 0.0
  %v519 = vadd.f32 %v517, %v518
  %v520 = vsel %vm267, %v90, 0.0
  %v521 = vadd.f32 %v519, %v520
  %v522 = vrot.slane %v521, 4
  %v523 = vadd.f32 %v521, %v522
  %v524 = vrot.slane %v523, 2
  %v525 = vadd.f32 %v523, %v524
  %v526 = vrot.slane %v525, 1
  %v527 = vadd.f32 %v525, %v526
  %v528 = vsel %vm267, %v91, 0.0
  %v529 = vsel %vm267, %v92, 0.0
  %v530 = vadd.f32 %v528, %v529
  %v531 = vsel %vm267, %v93, 0.0
  %v532 = vadd.f32 %v530, %v531
  %v533 = vsel %vm267, %v94, 0.0
  %v534 = vadd.f32 %v532, %v533
  %v535 = vrot.slane %v534, 4
  %v536 = vadd.f32 %v534, %v535
  %v537 = vrot.slane %v536, 2
  %v538 = vadd.f32 %v536, %v537
  %v539 = vrot.slane %v538, 1
  %v540 = vadd.f32 %v538, %v539
  %v541 = vsel %vm267, %v95, 0.0
  %v542 = vsel %vm267, %v96, 0.0
  %v543 = vadd.f32 %v541, %v542
  %v544 = vsel %vm267, %v97, 0.0
  %v545 = vadd.f32 %v543, %v544
  %v546 = vsel %vm267, %v98, 0.0
  %v547 = vadd.f32 %v545, %v546
  %v548 = vrot.slane %v547, 4
  %v549 = vadd.f32 %v547, %v548
  %v550 = vrot.slane %v549, 2
  %v551 = vadd.f32 %v549, %v550
  %v552 = vrot.slane %v551, 1
  %v553 = vadd.f32 %v551, %v552
  %v554 = vsel %vm267, %v99, 0.0
  %v555 = vsel %vm267, %v100, 0.0
  %v556 = vadd.f32 %v554, %v555
  %v557 = vsel %vm267, %v101, 0.0
  %v558 = vadd.f32 %v556, %v557
  %v559 = vsel %vm267, %v102, 0.0
  %v560 = vadd.f32 %v558, %v559
  %v561 = vrot.slane %v560, 4
  %v562 = vadd.f32 %v560, %v561
  %v563 = vrot.slane %v562, 2
  %v564 = vadd.f32 %v562, %v563
  %v565 = vrot.slane %v564, 1
  %v566 = vadd.f32 %v564, %v565
  %v567 = vsel %vm267, %v103, 0.0
  %v568 = vsel %vm267, %v104, 0.0
  %v569 = vadd.f32 %v567, %v568
  %v570 = vsel %vm267, %v105, 0.0
  %v571 = vadd.f32 %v569, %v570
  %v572 = vsel %vm267, %v106, 0.0
  %v573 = vadd.f32 %v571, %v572
  %v574 = vrot.slane %v573, 4
  %v575 = vadd.f32 %v573, %v574
  %v576 = vrot.slane %v575, 2
  %v577 = vadd.f32 %v575, %v576
  %v578 = vrot.slane %v577, 1
  %v579 = vadd.f32 %v577, %v578
  %v580 = vsel %vm267, %v107, 0.0
  %v581 = vsel %vm267, %v108, 0.0
  %v582 = vadd.f32 %v580, %v581
  %v583 = vsel %vm267, %v109, 0.0
  %v584 = vadd.f32 %v582, %v583
  %v585 = vsel %vm267, %v110, 0.0
  %v586 = vadd.f32 %v584, %v585
  %v587 = vrot.slane %v586, 4
  %v588 = vadd.f32 %v586, %v587
  %v589 = vrot.slane %v588, 2
  %v590 = vadd.f32 %v588, %v589
  %v591 = vrot.slane %v590, 1
  %v592 = vadd.f32 %v590, %v591
  %v593 = vsel %vm267, %v111, 0.0
  %v594 = vsel %vm267, %v112, 0.0
  %v595 = vadd.f32 %v593, %v594
  %v596 = vsel %vm267, %v113, 0.0
  %v597 = vadd.f32 %v595, %v596
  %v598 = vsel %vm267, %v114, 0.0
  %v599 = vadd.f32 %v597, %v598
  %v600 = vrot.slane %v599, 4
  %v601 = vadd.f32 %v599, %v600
  %v602 = vrot.slane %v601, 2
  %v603 = vadd.f32 %v601, %v602
  %v604 = vrot.slane %v603, 1
  %v605 = vadd.f32 %v603, %v604
  %v606 = vsel %vm267, %v115, 0.0
  %v607 = vsel %vm267, %v116, 0.0
  %v608 = vadd.f32 %v606, %v607
  %v609 = vsel %vm267, %v117, 0.0
  %v610 = vadd.f32 %v608, %v609
  %v611 = vsel %vm267, %v118, 0.0
  %v612 = vadd.f32 %v610, %v611
  %v613 = vrot.slane %v612, 4
  %v614 = vadd.f32 %v612, %v613
  %v615 = vrot.slane %v614, 2
  %v616 = vadd.f32 %v614, %v615
  %v617 = vrot.slane %v616, 1
  %v618 = vadd.f32 %v616, %v617
  %v619 = vsel %vm267, %v119, 0.0
  %v620 = vsel %vm267, %v120, 0.0
  %v621 = vadd.f32 %v619, %v620
  %v622 = vsel %vm267, %v121, 0.0
  %v623 = vadd.f32 %v621, %v622
  %v624 = vsel %vm267, %v122, 0.0
  %v625 = vadd.f32 %v623, %v624
  %v626 = vrot.slane %v625, 4
  %v627 = vadd.f32 %v625, %v626
  %v628 = vrot.slane %v627, 2
  %v629 = vadd.f32 %v627, %v628
  %v630 = vrot.slane %v629, 1
  %v631 = vadd.f32 %v629, %v630
  %v632 = vsel %vm267, %v123, 0.0
  %v633 = vsel %vm267, %v124, 0.0
  %v634 = vadd.f32 %v632, %v633
  %v635 = vsel %vm267, %v125, 0.0
  %v636 = vadd.f32 %v634, %v635
  %v637 = vsel %vm267, %v126, 0.0
  %v638 = vadd.f32 %v636, %v637
  %v639 = vrot.slane %v638, 4
  %v640 = vadd.f32 %v638, %v639
  %v641 = vrot.slane %v640, 2
  %v642 = vadd.f32 %v640, %v641
  %v643 = vrot.slane %v642, 1
  %v644 = vadd.f32 %v642, %v643
  %v645 = vsel %vm267, %v127, 0.0
  %v646 = vsel %vm267, %v128, 0.0
  %v647 = vadd.f32 %v645, %v646
  %v648 = vsel %vm267, %v129, 0.0
  %v649 = vadd.f32 %v647, %v648
  %v650 = vsel %vm267, %v130, 0.0
  %v651 = vadd.f32 %v649, %v650
  %v652 = vrot.slane %v651, 4
  %v653 = vadd.f32 %v651, %v652
  %v654 = vrot.slane %v653, 2
  %v655 = vadd.f32 %v653, %v654
  %v656 = vrot.slane %v655, 1
  %v657 = vadd.f32 %v655, %v656
  %v658 = vsel %vm267, %v131, 0.0
  %v659 = vsel %vm267, %v132, 0.0
  %v660 = vadd.f32 %v658, %v659
  %v661 = vsel %vm267, %v133, 0.0
  %v662 = vadd.f32 %v660, %v661
  %v663 = vsel %vm267, %v134, 0.0
  %v664 = vadd.f32 %v662, %v663
  %v665 = vrot.slane %v664, 4
  %v666 = vadd.f32 %v664, %v665
  %v667 = vrot.slane %v666, 2
  %v668 = vadd.f32 %v666, %v667
  %v669 = vrot.slane %v668, 1
  %v670 = vadd.f32 %v668, %v669
  %v671 = vsel %vm267, %v135, 0.0
  %v672 = vsel %vm267, %v136, 0.0
  %v673 = vadd.f32 %v671, %v672
  %v674 = vsel %vm267, %v137, 0.0
  %v675 = vadd.f32 %v673, %v674
  %v676 = vsel %vm267, %v138, 0.0
  %v677 = vadd.f32 %v675, %v676
  %v678 = vrot.slane %v677, 4
  %v679 = vadd.f32 %v677, %v678
  %v680 = vrot.slane %v679, 2
  %v681 = vadd.f32 %v679, %v680
  %v682 = vrot.slane %v681, 1
  %v683 = vadd.f32 %v681, %v682
  %v684 = vsel %vm267, %v139, 0.0
  %v685 = vsel %vm267, %v140, 0.0
  %v686 = vadd.f32 %v684, %v685
  %v687 = vsel %vm267, %v141, 0.0
  %v688 = vadd.f32 %v686, %v687
  %v689 = vsel %vm267, %v142, 0.0
  %v690 = vadd.f32 %v688, %v689
  %v691 = vrot.slane %v690, 4
  %v692 = vadd.f32 %v690, %v691
  %v693 = vrot.slane %v692, 2
  %v694 = vadd.f32 %v692, %v693
  %v695 = vrot.slane %v694, 1
  %v696 = vadd.f32 %v694, %v695
  %v697 = vsel %vm267, %v143, 0.0
  %v698 = vsel %vm267, %v144, 0.0
  %v699 = vadd.f32 %v697, %v698
  %v700 = vsel %vm267, %v145, 0.0
  %v701 = vadd.f32 %v699, %v700
  %v702 = vsel %vm267, %v146, 0.0
  %v703 = vadd.f32 %v701, %v702
  %v704 = vrot.slane %v703, 4
  %v705 = vadd.f32 %v703, %v704
  %v706 = vrot.slane %v705, 2
  %v707 = vadd.f32 %v705, %v706
  %v708 = vrot.slane %v707, 1
  %v709 = vadd.f32 %v707, %v708
  %v710 = vsel %vm267, %v147, 0.0
  %v711 = vsel %vm267, %v148, 0.0
  %v712 = vadd.f32 %v710, %v711
  %v713 = vsel %vm267, %v149, 0.0
  %v714 = vadd.f32 %v712, %v713
  %v715 = vsel %vm267, %v150, 0.0
  %v716 = vadd.f32 %v714, %v715
  %v717 = vrot.slane %v716, 4
  %v718 = vadd.f32 %v716, %v717
  %v719 = vrot.slane %v718, 2
  %v720 = vadd.f32 %v718, %v719
  %v721 = vrot.slane %v720, 1
  %v722 = vadd.f32 %v720, %v721
  %v723 = vsel %vm267, %v151, 0.0
  %v724 = vsel %vm267, %v152, 0.0
  %v725 = vadd.f32 %v723, %v724
  %v726 = vsel %vm267, %v153, 0.0
  %v727 = vadd.f32 %v725, %v726
  %v728 = vsel %vm267, %v154, 0.0
  %v729 = vadd.f32 %v727, %v728
  %v730 = vrot.slane %v729, 4
  %v731 = vadd.f32 %v729, %v730
  %v732 = vrot.slane %v731, 2
  %v733 = vadd.f32 %v731, %v732
  %v734 = vrot.slane %v733, 1
  %v735 = vadd.f32 %v733, %v734
  %v736 = vsel %vm267, %v155, 0.0
  %v737 = vsel %vm267, %v156, 0.0
  %v738 = vadd.f32 %v736, %v737
  %v739 = vsel %vm267, %v157, 0.0
  %v740 = vadd.f32 %v738, %v739
  %v741 = vsel %vm267, %v158, 0.0
  %v742 = vadd.f32 %v740, %v741
  %v743 = vrot.slane %v742, 4
  %v744 = vadd.f32 %v742, %v743
  %v745 = vrot.slane %v744, 2
  %v746 = vadd.f32 %v744, %v745
  %v747 = vrot.slane %v746, 1
  %v748 = vadd.f32 %v746, %v747
  %v749 = vsel %vm267, %v159, 0.0
  %v750 = vsel %vm267, %v160, 0.0
  %v751 = vadd.f32 %v749, %v750
  %v752 = vsel %vm267, %v161, 0.0
  %v753 = vadd.f32 %v751, %v752
  %v754 = vsel %vm267, %v162, 0.0
  %v755 = vadd.f32 %v753, %v754
  %v756 = vrot.slane %v755, 4
  %v757 = vadd.f32 %v755, %v756
  %v758 = vrot.slane %v757, 2
  %v759 = vadd.f32 %v757, %v758
  %v760 = vrot.slane %v759, 1
  %v761 = vadd.f32 %v759, %v760
  %v762 = vsel %vm267, %v163, 0.0
  %v763 = vsel %vm267, %v164, 0.0
  %v764 = vadd.f32 %v762, %v763
  %v765 = vsel %vm267, %v165, 0.0
  %v766 = vadd.f32 %v764, %v765
  %v767 = vsel %vm267, %v166, 0.0
  %v768 = vadd.f32 %v766, %v767
  %v769 = vrot.slane %v768, 4
  %v770 = vadd.f32 %v768, %v769
  %v771 = vrot.slane %v770, 2
  %v772 = vadd.f32 %v770, %v771
  %v773 = vrot.slane %v772, 1
  %v774 = vadd.f32 %v772, %v773
  %v775 = vsel %vm267, %v167, 0.0
  %v776 = vsel %vm267, %v168, 0.0
  %v777 = vadd.f32 %v775, %v776
  %v778 = vsel %vm267, %v169, 0.0
  %v779 = vadd.f32 %v777, %v778
  %v780 = vsel %vm267, %v170, 0.0
  %v781 = vadd.f32 %v779, %v780
  %v782 = vrot.slane %v781, 4
  %v783 = vadd.f32 %v781, %v782
  %v784 = vrot.slane %v783, 2
  %v785 = vadd.f32 %v783, %v784
  %v786 = vrot.slane %v785, 1
  %v787 = vadd.f32 %v785, %v786
  %v788 = vsel %vm267, %v171, 0.0
  %v789 = vsel %vm267, %v172, 0.0
  %v790 = vadd.f32 %v788, %v789
  %v791 = vsel %vm267, %v173, 0.0
  %v792 = vadd.f32 %v790, %v791
  %v793 = vsel %vm267, %v174, 0.0
  %v794 = vadd.f32 %v792, %v793
  %v795 = vrot.slane %v794, 4
  %v796 = vadd.f32 %v794, %v795
  %v797 = vrot.slane %v796, 2
  %v798 = vadd.f32 %v796, %v797
  %v799 = vrot.slane %v798, 1
  %v800 = vadd.f32 %v798, %v799
  %v801 = vsel %vm267, %v175, 0.0
  %v802 = vsel %vm267, %v176, 0.0
  %v803 = vadd.f32 %v801, %v802
  %v804 = vsel %vm267, %v177, 0.0
  %v805 = vadd.f32 %v803, %v804
  %v806 = vsel %vm267, %v178, 0.0
  %v807 = vadd.f32 %v805, %v806
  %v808 = vrot.slane %v807, 4
  %v809 = vadd.f32 %v807, %v808
  %v810 = vrot.slane %v809, 2
  %v811 = vadd.f32 %v809, %v810
  %v812 = vrot.slane %v811, 1
  %v813 = vadd.f32 %v811, %v812
  %v814 = vsel %vm267, %v179, 0.0
  %v815 = vsel %vm267, %v180, 0.0
  %v816 = vadd.f32 %v814, %v815
  %v817 = vsel %vm267, %v181, 0.0
  %v818 = vadd.f32 %v816, %v817
  %v819 = vsel %vm267, %v182, 0.0
  %v820 = vadd.f32 %v818, %v819
  %v821 = vrot.slane %v820, 4
  %v822 = vadd.f32 %v820, %v821
  %v823 = vrot.slane %v822, 2
  %v824 = vadd.f32 %v822, %v823
  %v825 = vrot.slane %v824, 1
  %v826 = vadd.f32 %v824, %v825
  %v827 = vsel %vm267, %v183, 0.0
  %v828 = vsel %vm267, %v184, 0.0
  %v829 = vadd.f32 %v827, %v828
  %v830 = vsel %vm267, %v185, 0.0
  %v831 = vadd.f32 %v829, %v830
  %v832 = vsel %vm267, %v186, 0.0
  %v833 = vadd.f32 %v831, %v832
  %v834 = vrot.slane %v833, 4
  %v835 = vadd.f32 %v833, %v834
  %v836 = vrot.slane %v835, 2
  %v837 = vadd.f32 %v835, %v836
  %v838 = vrot.slane %v837, 1
  %v839 = vadd.f32 %v837, %v838
  %v840 = vsel %vm267, %v187, 0.0
  %v841 = vsel %vm267, %v188, 0.0
  %v842 = vadd.f32 %v840, %v841
  %v843 = vsel %vm267, %v189, 0.0
  %v844 = vadd.f32 %v842, %v843
  %v845 = vsel %vm267, %v190, 0.0
  %v846 = vadd.f32 %v844, %v845
  %v847 = vrot.slane %v846, 4
  %v848 = vadd.f32 %v846, %v847
  %v849 = vrot.slane %v848, 2
  %v850 = vadd.f32 %v848, %v849
  %v851 = vrot.slane %v850, 1
  %v852 = vadd.f32 %v850, %v851
  %v853 = vsel %vm267, %v191, 0.0
  %v854 = vsel %vm267, %v192, 0.0
  %v855 = vadd.f32 %v853, %v854
  %v856 = vsel %vm267, %v193, 0.0
  %v857 = vadd.f32 %v855, %v856
  %v858 = vsel %vm267, %v194, 0.0
  %v859 = vadd.f32 %v857, %v858
  %v860 = vrot.slane %v859, 4
  %v861 = vadd.f32 %v859, %v860
  %v862 = vrot.slane %v861, 2
  %v863 = vadd.f32 %v861, %v862
  %v864 = vrot.slane %v863, 1
  %v865 = vadd.f32 %v863, %v864
  %v866 = vsel %vm267, %v195, 0.0
  %v867 = vsel %vm267, %v196, 0.0
  %v868 = vadd.f32 %v866, %v867
  %v869 = vsel %vm267, %v197, 0.0
  %v870 = vadd.f32 %v868, %v869
  %v871 = vsel %vm267, %v198, 0.0
  %v872 = vadd.f32 %v870, %v871
  %v873 = vrot.slane %v872, 4
  %v874 = vadd.f32 %v872, %v873
  %v875 = vrot.slane %v874, 2
  %v876 = vadd.f32 %v874, %v875
  %v877 = vrot.slane %v876, 1
  %v878 = vadd.f32 %v876, %v877
  %v879 = vsel %vm267, %v199, 0.0
  %v880 = vsel %vm267, %v200, 0.0
  %v881 = vadd.f32 %v879, %v880
  %v882 = vsel %vm267, %v201, 0.0
  %v883 = vadd.f32 %v881, %v882
  %v884 = vsel %vm267, %v202, 0.0
  %v885 = vadd.f32 %v883, %v884
  %v886 = vrot.slane %v885, 4
  %v887 = vadd.f32 %v885, %v886
  %v888 = vrot.slane %v887, 2
  %v889 = vadd.f32 %v887, %v888
  %v890 = vrot.slane %v889, 1
  %v891 = vadd.f32 %v889, %v890
  %v892 = vsel %vm267, %v203, 0.0
  %v893 = vsel %vm267, %v204, 0.0
  %v894 = vadd.f32 %v892, %v893
  %v895 = vsel %vm267, %v205, 0.0
  %v896 = vadd.f32 %v894, %v895
  %v897 = vsel %vm267, %v206, 0.0
  %v898 = vadd.f32 %v896, %v897
  %v899 = vrot.slane %v898, 4
  %v900 = vadd.f32 %v898, %v899
  %v901 = vrot.slane %v900, 2
  %v902 = vadd.f32 %v900, %v901
  %v903 = vrot.slane %v902, 1
  %v904 = vadd.f32 %v902, %v903
  %v905 = vsel %vm267, %v207, 0.0
  %v906 = vsel %vm267, %v208, 0.0
  %v907 = vadd.f32 %v905, %v906
  %v908 = vsel %vm267, %v209, 0.0
  %v909 = vadd.f32 %v907, %v908
  %v910 = vsel %vm267, %v210, 0.0
  %v911 = vadd.f32 %v909, %v910
  %v912 = vrot.slane %v911, 4
  %v913 = vadd.f32 %v911, %v912
  %v914 = vrot.slane %v913, 2
  %v915 = vadd.f32 %v913, %v914
  %v916 = vrot.slane %v915, 1
  %v917 = vadd.f32 %v915, %v916
  %v918 = vsel %vm267, %v211, 0.0
  %v919 = vsel %vm267, %v212, 0.0
  %v920 = vadd.f32 %v918, %v919
  %v921 = vsel %vm267, %v213, 0.0
  %v922 = vadd.f32 %v920, %v921
  %v923 = vsel %vm267, %v214, 0.0
  %v924 = vadd.f32 %v922, %v923
  %v925 = vrot.slane %v924, 4
  %v926 = vadd.f32 %v924, %v925
  %v927 = vrot.slane %v926, 2
  %v928 = vadd.f32 %v926, %v927
  %v929 = vrot.slane %v928, 1
  %v930 = vadd.f32 %v928, %v929
  %v931 = vsel %vm267, %v215, 0.0
  %v932 = vsel %vm267, %v216, 0.0
  %v933 = vadd.f32 %v931, %v932
  %v934 = vsel %vm267, %v217, 0.0
  %v935 = vadd.f32 %v933, %v934
  %v936 = vsel %vm267, %v218, 0.0
  %v937 = vadd.f32 %v935, %v936
  %v938 = vrot.slane %v937, 4
  %v939 = vadd.f32 %v937, %v938
  %v940 = vrot.slane %v939, 2
  %v941 = vadd.f32 %v939, %v940
  %v942 = vrot.slane %v941, 1
  %v943 = vadd.f32 %v941, %v942
  %v944 = vsel %vm267, %v219, 0.0
  %v945 = vsel %vm267, %v220, 0.0
  %v946 = vadd.f32 %v944, %v945
  %v947 = vsel %vm267, %v221, 0.0
  %v948 = vadd.f32 %v946, %v947
  %v949 = vsel %vm267, %v222, 0.0
  %v950 = vadd.f32 %v948, %v949
  %v951 = vrot.slane %v950, 4
  %v952 = vadd.f32 %v950, %v951
  %v953 = vrot.slane %v952, 2
  %v954 = vadd.f32 %v952, %v953
  %v955 = vrot.slane %v954, 1
  %v956 = vadd.f32 %v954, %v955
  %v957 = vsel %vm267, %v223, 0.0
  %v958 = vsel %vm267, %v224, 0.0
  %v959 = vadd.f32 %v957, %v958
  %v960 = vsel %vm267, %v225, 0.0
  %v961 = vadd.f32 %v959, %v960
  %v962 = vsel %vm267, %v226, 0.0
  %v963 = vadd.f32 %v961, %v962
  %v964 = vrot.slane %v963, 4
  %v965 = vadd.f32 %v963, %v964
  %v966 = vrot.slane %v965, 2
  %v967 = vadd.f32 %v965, %v966
  %v968 = vrot.slane %v967, 1
  %v969 = vadd.f32 %v967, %v968
  %v970 = vsel %vm267, %v227, 0.0
  %v971 = vsel %vm267, %v228, 0.0
  %v972 = vadd.f32 %v970, %v971
  %v973 = vsel %vm267, %v229, 0.0
  %v974 = vadd.f32 %v972, %v973
  %v975 = vsel %vm267, %v230, 0.0
  %v976 = vadd.f32 %v974, %v975
  %v977 = vrot.slane %v976, 4
  %v978 = vadd.f32 %v976, %v977
  %v979 = vrot.slane %v978, 2
  %v980 = vadd.f32 %v978, %v979
  %v981 = vrot.slane %v980, 1
  %v982 = vadd.f32 %v980, %v981
  %v983 = vsel %vm267, %v231, 0.0
  %v984 = vsel %vm267, %v232, 0.0
  %v985 = vadd.f32 %v983, %v984
  %v986 = vsel %vm267, %v233, 0.0
  %v987 = vadd.f32 %v985, %v986
  %v988 = vsel %vm267, %v234, 0.0
  %v989 = vadd.f32 %v987, %v988
  %v990 = vrot.slane %v989, 4
  %v991 = vadd.f32 %v989, %v990
  %v992 = vrot.slane %v991, 2
  %v993 = vadd.f32 %v991, %v992
  %v994 = vrot.slane %v993, 1
  %v995 = vadd.f32 %v993, %v994
  %v996 = vsel %vm267, %v235, 0.0
  %v997 = vsel %vm267, %v236, 0.0
  %v998 = vadd.f32 %v996, %v997
  %v999 = vsel %vm267, %v237, 0.0
  %v1000 = vadd.f32 %v998, %v999
  %v1001 = vsel %vm267, %v238, 0.0
  %v1002 = vadd.f32 %v1000, %v1001
  %v1003 = vrot.slane %v1002, 4
  %v1004 = vadd.f32 %v1002, %v1003
  %v1005 = vrot.slane %v1004, 2
  %v1006 = vadd.f32 %v1004, %v1005
  %v1007 = vrot.slane %v1006, 1
  %v1008 = vadd.f32 %v1006, %v1007
  %v1009 = vsel %vm267, %v239, 0.0
  %v1010 = vsel %vm267, %v240, 0.0
  %v1011 = vadd.f32 %v1009, %v1010
  %v1012 = vsel %vm267, %v241, 0.0
  %v1013 = vadd.f32 %v1011, %v1012
  %v1014 = vsel %vm267, %v242, 0.0
  %v1015 = vadd.f32 %v1013, %v1014
  %v1016 = vrot.slane %v1015, 4
  %v1017 = vadd.f32 %v1015, %v1016
  %v1018 = vrot.slane %v1017, 2
  %v1019 = vadd.f32 %v1017, %v1018
  %v1020 = vrot.slane %v1019, 1
  %v1021 = vadd.f32 %v1019, %v1020
  %v1022 = vsel %vm267, %v243, 0.0
  %v1023 = vsel %vm267, %v244, 0.0
  %v1024 = vadd.f32 %v1022, %v1023
  %v1025 = vsel %vm267, %v245, 0.0
  %v1026 = vadd.f32 %v1024, %v1025
  %v1027 = vsel %vm267, %v246, 0.0
  %v1028 = vadd.f32 %v1026, %v1027
  %v1029 = vrot.slane %v1028, 4
  %v1030 = vadd.f32 %v1028, %v1029
  %v1031 = vrot.slane %v1030, 2
  %v1032 = vadd.f32 %v1030, %v1031
  %v1033 = vrot.slane %v1032, 1
  %v1034 = vadd.f32 %v1032, %v1033
  %v1035 = vsel %vm267, %v247, 0.0
  %v1036 = vsel %vm267, %v248, 0.0
  %v1037 = vadd.f32 %v1035, %v1036
  %v1038 = vsel %vm267, %v249, 0.0
  %v1039 = vadd.f32 %v1037, %v1038
  %v1040 = vsel %vm267, %v250, 0.0
  %v1041 = vadd.f32 %v1039, %v1040
  %v1042 = vrot.slane %v1041, 4
  %v1043 = vadd.f32 %v1041, %v1042
  %v1044 = vrot.slane %v1043, 2
  %v1045 = vadd.f32 %v1043, %v1044
  %v1046 = vrot.slane %v1045, 1
  %v1047 = vadd.f32 %v1045, %v1046
  %v1048 = vsel %vm267, %v251, 0.0
  %v1049 = vsel %vm267, %v252, 0.0
  %v1050 = vadd.f32 %v1048, %v1049
  %v1051 = vsel %vm267, %v253, 0.0
  %v1052 = vadd.f32 %v1050, %v1051
  %v1053 = vsel %vm267, %v254, 0.0
  %v1054 = vadd.f32 %v1052, %v1053
  %v1055 = vrot.slane %v1054, 4
  %v1056 = vadd.f32 %v1054, %v1055
  %v1057 = vrot.slane %v1056, 2
  %v1058 = vadd.f32 %v1056, %v1057
  %v1059 = vrot.slane %v1058, 1
  %v1060 = vadd.f32 %v1058, %v1059
  %v1061 = vsel %vm267, %v255, 0.0
  %v1062 = vsel %vm267, %v256, 0.0
  %v1063 = vadd.f32 %v1061, %v1062
  %v1064 = vsel %vm267, %v257, 0.0
  %v1065 = vadd.f32 %v1063, %v1064
  %v1066 = vsel %vm267, %v258, 0.0
  %v1067 = vadd.f32 %v1065, %v1066
  %v1068 = vrot.slane %v1067, 4
  %v1069 = vadd.f32 %v1067, %v1068
  %v1070 = vrot.slane %v1069, 2
  %v1071 = vadd.f32 %v1069, %v1070
  %v1072 = vrot.slane %v1071, 1
  %v1073 = vadd.f32 %v1071, %v1072
  %v1074 = vsel %vm267, %v259, 0.0
  %v1075 = vsel %vm267, %v260, 0.0
  %v1076 = vadd.f32 %v1074, %v1075
  %v1077 = vsel %vm267, %v261, 0.0
  %v1078 = vadd.f32 %v1076, %v1077
  %v1079 = vsel %vm267, %v262, 0.0
  %v1080 = vadd.f32 %v1078, %v1079
  %v1081 = vrot.slane %v1080, 4
  %v1082 = vadd.f32 %v1080, %v1081
  %v1083 = vrot.slane %v1082, 2
  %v1084 = vadd.f32 %v1082, %v1083
  %v1085 = vrot.slane %v1084, 1
  %v1086 = vadd.f32 %v1084, %v1085
  %v1087 = vsel %vm267, %v263, 0.0
  %v1088 = vsel %vm267, %v264, 0.0
  %v1089 = vadd.f32 %v1087, %v1088
  %v1090 = vsel %vm267, %v265, 0.0
  %v1091 = vadd.f32 %v1089, %v1090
  %v1092 = vsel %vm267, %v266, 0.0
  %v1093 = vadd.f32 %v1091, %v1092
  %v1094 = vrot.slane %v1093, 4
  %v1095 = vadd.f32 %v1093, %v1094
  %v1096 = vrot.slane %v1095, 2
  %v1097 = vadd.f32 %v1095, %v1096
  %v1098 = vrot.slane %v1097, 1
  %v1099 = vadd.f32 %v1097, %v1098
  %v1100 = vld [vmem:[%s1] sm:$0xff]
  %v1101 = vld [vmem:[%s1 + $0x8] sm:$0xff]
  %v1102 = vld [vmem:[%s1 + $0x10] sm:$0xff]
  %v1103 = vld [vmem:[%s1 + $0x18] sm:$0xff]
  %v1104 = vld [vmem:[%s1 + $0x20] sm:$0xff]
  %v1105 = vld [vmem:[%s1 + $0x28] sm:$0xff]
  %v1106 = vld [vmem:[%s1 + $0x30] sm:$0xff]
  %v1107 = vld [vmem:[%s1 + $0x38] sm:$0xff]
  %1109 = vset.pattern.permute.xlu0 0
  %1110 = vperm.xlu0 %1109, %v1100
  %v1111 = vpop.permute.xlu0 %1110
  %1113 = vset.pattern.permute.xlu0 0
  %1114 = vperm.xlu0 %1113, %v1101
  %v1115 = vpop.permute.xlu0 %1114
  %1117 = vset.pattern.permute.xlu0 0
  %1118 = vperm.xlu0 %1117, %v1102
  %v1119 = vpop.permute.xlu0 %1118
  %1121 = vset.pattern.permute.xlu0 0
  %1122 = vperm.xlu0 %1121, %v1103
  %v1123 = vpop.permute.xlu0 %1122
  %1125 = vset.pattern.permute.xlu0 0
  %1126 = vperm.xlu0 %1125, %v1104
  %v1127 = vpop.permute.xlu0 %1126
  %1129 = vset.pattern.permute.xlu0 0
  %1130 = vperm.xlu0 %1129, %v1105
  %v1131 = vpop.permute.xlu0 %1130
  %1133 = vset.pattern.permute.xlu0 0
  %1134 = vperm.xlu0 %1133, %v1106
  %v1135 = vpop.permute.xlu0 %1134
  %1137 = vset.pattern.permute.xlu0 0
  %1138 = vperm.xlu0 %1137, %v1107
  %v1139 = vpop.permute.xlu0 %1138
  %v1140 = vrot.slane %v1111, 1
  %v1141 = vrot.slane %v1111, 2
  %v1142 = vrot.slane %v1111, 3
  %v1143 = vrot.slane %v1111, 4
  %v1144 = vrot.slane %v1111, 5
  %v1145 = vrot.slane %v1111, 6
  %v1146 = vrot.slane %v1111, 7
  %v1147 = vrot.slane %v1115, 1
  %v1148 = vrot.slane %v1115, 2
  %v1149 = vrot.slane %v1115, 3
  %v1150 = vrot.slane %v1115, 4
  %v1151 = vrot.slane %v1115, 5
  %v1152 = vrot.slane %v1115, 6
  %v1153 = vrot.slane %v1115, 7
  %v1154 = vrot.slane %v1119, 1
  %v1155 = vrot.slane %v1119, 2
  %v1156 = vrot.slane %v1119, 3
  %v1157 = vrot.slane %v1119, 4
  %v1158 = vrot.slane %v1119, 5
  %v1159 = vrot.slane %v1119, 6
  %v1160 = vrot.slane %v1119, 7
  %v1161 = vrot.slane %v1123, 1
  %v1162 = vrot.slane %v1123, 2
  %v1163 = vrot.slane %v1123, 3
  %v1164 = vrot.slane %v1123, 4
  %v1165 = vrot.slane %v1123, 5
  %v1166 = vrot.slane %v1123, 6
  %v1167 = vrot.slane %v1123, 7
  %v1168 = vrot.slane %v1127, 1
  %v1169 = vrot.slane %v1127, 2
  %v1170 = vrot.slane %v1127, 3
  %v1171 = vrot.slane %v1127, 4
  %v1172 = vrot.slane %v1127, 5
  %v1173 = vrot.slane %v1127, 6
  %v1174 = vrot.slane %v1127, 7
  %v1175 = vrot.slane %v1131, 1
  %v1176 = vrot.slane %v1131, 2
  %v1177 = vrot.slane %v1131, 3
  %v1178 = vrot.slane %v1131, 4
  %v1179 = vrot.slane %v1131, 5
  %v1180 = vrot.slane %v1131, 6
  %v1181 = vrot.slane %v1131, 7
  %v1182 = vrot.slane %v1135, 1
  %v1183 = vrot.slane %v1135, 2
  %v1184 = vrot.slane %v1135, 3
  %v1185 = vrot.slane %v1135, 4
  %v1186 = vrot.slane %v1135, 5
  %v1187 = vrot.slane %v1135, 6
  %v1188 = vrot.slane %v1135, 7
  %v1189 = vrot.slane %v1139, 1
  %v1190 = vrot.slane %v1139, 2
  %v1191 = vrot.slane %v1139, 3
  %v1192 = vrot.slane %v1139, 4
  %v1193 = vrot.slane %v1139, 5
  %v1194 = vrot.slane %v1139, 6
  %v1195 = vrot.slane %v1139, 7
  %v1260 = vrcp.pop %v1111
  %v1261 = vmul.f32 %v1111, %v1260
  %v1262 = vsub.f32 1.0, %v1261
  %v1263 = vmul.f32 %v1260, %v1262
  %v1264 = vadd.f32 %v1260, %v1263
  %vm1265 = vweird.f32 %v1111
  %vm1266 = vweird.f32 %v1260
  %vm1267 = vmor %vm1265, %vm1266
  %v1268 = vsel %vm1267, %v1260, %v1264
  %v1269 = vand.u32 2147483647, %v1111
  %vm1270 = vcmp.eq.f32.partialorder %v1269, 8.507059e+37
  %v1271 = vand.u32 %v1111, 2147483648
  %v1272 = vor.u32 1.1754944e-38, %v1271
  %v1273 = vsel %vm1270, %v1272, %v1268
  %v1274 = vmul.f32 %v280, %v1273
  %v1275 = vrcp.pop %v1140
  %v1276 = vmul.f32 %v1140, %v1275
  %v1277 = vsub.f32 1.0, %v1276
  %v1278 = vmul.f32 %v1275, %v1277
  %v1279 = vadd.f32 %v1275, %v1278
  %vm1280 = vweird.f32 %v1140
  %vm1281 = vweird.f32 %v1275
  %vm1282 = vmor %vm1280, %vm1281
  %v1283 = vsel %vm1282, %v1275, %v1279
  %v1284 = vand.u32 2147483647, %v1140
  %vm1285 = vcmp.eq.f32.partialorder %v1284, 8.507059e+37
  %v1286 = vand.u32 %v1140, 2147483648
  %v1287 = vor.u32 1.1754944e-38, %v1286
  %v1288 = vsel %vm1285, %v1287, %v1283
  %v1289 = vmul.f32 %v293, %v1288
  %v1290 = vrcp.pop %v1141
  %v1291 = vmul.f32 %v1141, %v1290
  %v1292 = vsub.f32 1.0, %v1291
  %v1293 = vmul.f32 %v1290, %v1292
  %v1294 = vadd.f32 %v1290, %v1293
  %vm1295 = vweird.f32 %v1141
  %vm1296 = vweird.f32 %v1290
  %vm1297 = vmor %vm1295, %vm1296
  %v1298 = vsel %vm1297, %v1290, %v1294
  %v1299 = vand.u32 2147483647, %v1141
  %vm1300 = vcmp.eq.f32.partialorder %v1299, 8.507059e+37
  %v1301 = vand.u32 %v1141, 2147483648
  %v1302 = vor.u32 1.1754944e-38, %v1301
  %v1303 = vsel %vm1300, %v1302, %v1298
  %v1304 = vmul.f32 %v306, %v1303
  %v1305 = vrcp.pop %v1142
  %v1306 = vmul.f32 %v1142, %v1305
  %v1307 = vsub.f32 1.0, %v1306
  %v1308 = vmul.f32 %v1305, %v1307
  %v1309 = vadd.f32 %v1305, %v1308
  %vm1310 = vweird.f32 %v1142
  %vm1311 = vweird.f32 %v1305
  %vm1312 = vmor %vm1310, %vm1311
  %v1313 = vsel %vm1312, %v1305, %v1309
  %v1314 = vand.u32 2147483647, %v1142
  %vm1315 = vcmp.eq.f32.partialorder %v1314, 8.507059e+37
  %v1316 = vand.u32 %v1142, 2147483648
  %v1317 = vor.u32 1.1754944e-38, %v1316
  %v1318 = vsel %vm1315, %v1317, %v1313
  %v1319 = vmul.f32 %v319, %v1318
  %v1320 = vrcp.pop %v1143
  %v1321 = vmul.f32 %v1143, %v1320
  %v1322 = vsub.f32 1.0, %v1321
  %v1323 = vmul.f32 %v1320, %v1322
  %v1324 = vadd.f32 %v1320, %v1323
  %vm1325 = vweird.f32 %v1143
  %vm1326 = vweird.f32 %v1320
  %vm1327 = vmor %vm1325, %vm1326
  %v1328 = vsel %vm1327, %v1320, %v1324
  %v1329 = vand.u32 2147483647, %v1143
  %vm1330 = vcmp.eq.f32.partialorder %v1329, 8.507059e+37
  %v1331 = vand.u32 %v1143, 2147483648
  %v1332 = vor.u32 1.1754944e-38, %v1331
  %v1333 = vsel %vm1330, %v1332, %v1328
  %v1334 = vmul.f32 %v332, %v1333
  %v1335 = vrcp.pop %v1144
  %v1336 = vmul.f32 %v1144, %v1335
  %v1337 = vsub.f32 1.0, %v1336
  %v1338 = vmul.f32 %v1335, %v1337
  %v1339 = vadd.f32 %v1335, %v1338
  %vm1340 = vweird.f32 %v1144
  %vm1341 = vweird.f32 %v1335
  %vm1342 = vmor %vm1340, %vm1341
  %v1343 = vsel %vm1342, %v1335, %v1339
  %v1344 = vand.u32 2147483647, %v1144
  %vm1345 = vcmp.eq.f32.partialorder %v1344, 8.507059e+37
  %v1346 = vand.u32 %v1144, 2147483648
  %v1347 = vor.u32 1.1754944e-38, %v1346
  %v1348 = vsel %vm1345, %v1347, %v1343
  %v1349 = vmul.f32 %v345, %v1348
  %v1350 = vrcp.pop %v1145
  %v1351 = vmul.f32 %v1145, %v1350
  %v1352 = vsub.f32 1.0, %v1351
  %v1353 = vmul.f32 %v1350, %v1352
  %v1354 = vadd.f32 %v1350, %v1353
  %vm1355 = vweird.f32 %v1145
  %vm1356 = vweird.f32 %v1350
  %vm1357 = vmor %vm1355, %vm1356
  %v1358 = vsel %vm1357, %v1350, %v1354
  %v1359 = vand.u32 2147483647, %v1145
  %vm1360 = vcmp.eq.f32.partialorder %v1359, 8.507059e+37
  %v1361 = vand.u32 %v1145, 2147483648
  %v1362 = vor.u32 1.1754944e-38, %v1361
  %v1363 = vsel %vm1360, %v1362, %v1358
  %v1364 = vmul.f32 %v358, %v1363
  %v1365 = vrcp.pop %v1146
  %v1366 = vmul.f32 %v1146, %v1365
  %v1367 = vsub.f32 1.0, %v1366
  %v1368 = vmul.f32 %v1365, %v1367
  %v1369 = vadd.f32 %v1365, %v1368
  %vm1370 = vweird.f32 %v1146
  %vm1371 = vweird.f32 %v1365
  %vm1372 = vmor %vm1370, %vm1371
  %v1373 = vsel %vm1372, %v1365, %v1369
  %v1374 = vand.u32 2147483647, %v1146
  %vm1375 = vcmp.eq.f32.partialorder %v1374, 8.507059e+37
  %v1376 = vand.u32 %v1146, 2147483648
  %v1377 = vor.u32 1.1754944e-38, %v1376
  %v1378 = vsel %vm1375, %v1377, %v1373
  %v1379 = vmul.f32 %v371, %v1378
  %v1380 = vrcp.pop %v1115
  %v1381 = vmul.f32 %v1115, %v1380
  %v1382 = vsub.f32 1.0, %v1381
  %v1383 = vmul.f32 %v1380, %v1382
  %v1384 = vadd.f32 %v1380, %v1383
  %vm1385 = vweird.f32 %v1115
  %vm1386 = vweird.f32 %v1380
  %vm1387 = vmor %vm1385, %vm1386
  %v1388 = vsel %vm1387, %v1380, %v1384
  %v1389 = vand.u32 2147483647, %v1115
  %vm1390 = vcmp.eq.f32.partialorder %v1389, 8.507059e+37
  %v1391 = vand.u32 %v1115, 2147483648
  %v1392 = vor.u32 1.1754944e-38, %v1391
  %v1393 = vsel %vm1390, %v1392, %v1388
  %v1394 = vmul.f32 %v384, %v1393
  %v1395 = vrcp.pop %v1147
  %v1396 = vmul.f32 %v1147, %v1395
  %v1397 = vsub.f32 1.0, %v1396
  %v1398 = vmul.f32 %v1395, %v1397
  %v1399 = vadd.f32 %v1395, %v1398
  %vm1400 = vweird.f32 %v1147
  %vm1401 = vweird.f32 %v1395
  %vm1402 = vmor %vm1400, %vm1401
  %v1403 = vsel %vm1402, %v1395, %v1399
  %v1404 = vand.u32 2147483647, %v1147
  %vm1405 = vcmp.eq.f32.partialorder %v1404, 8.507059e+37
  %v1406 = vand.u32 %v1147, 2147483648
  %v1407 = vor.u32 1.1754944e-38, %v1406
  %v1408 = vsel %vm1405, %v1407, %v1403
  %v1409 = vmul.f32 %v397, %v1408
  %v1410 = vrcp.pop %v1148
  %v1411 = vmul.f32 %v1148, %v1410
  %v1412 = vsub.f32 1.0, %v1411
  %v1413 = vmul.f32 %v1410, %v1412
  %v1414 = vadd.f32 %v1410, %v1413
  %vm1415 = vweird.f32 %v1148
  %vm1416 = vweird.f32 %v1410
  %vm1417 = vmor %vm1415, %vm1416
  %v1418 = vsel %vm1417, %v1410, %v1414
  %v1419 = vand.u32 2147483647, %v1148
  %vm1420 = vcmp.eq.f32.partialorder %v1419, 8.507059e+37
  %v1421 = vand.u32 %v1148, 2147483648
  %v1422 = vor.u32 1.1754944e-38, %v1421
  %v1423 = vsel %vm1420, %v1422, %v1418
  %v1424 = vmul.f32 %v410, %v1423
  %v1425 = vrcp.pop %v1149
  %v1426 = vmul.f32 %v1149, %v1425
  %v1427 = vsub.f32 1.0, %v1426
  %v1428 = vmul.f32 %v1425, %v1427
  %v1429 = vadd.f32 %v1425, %v1428
  %vm1430 = vweird.f32 %v1149
  %vm1431 = vweird.f32 %v1425
  %vm1432 = vmor %vm1430, %vm1431
  %v1433 = vsel %vm1432, %v1425, %v1429
  %v1434 = vand.u32 2147483647, %v1149
  %vm1435 = vcmp.eq.f32.partialorder %v1434, 8.507059e+37
  %v1436 = vand.u32 %v1149, 2147483648
  %v1437 = vor.u32 1.1754944e-38, %v1436
  %v1438 = vsel %vm1435, %v1437, %v1433
  %v1439 = vmul.f32 %v423, %v1438
  %v1440 = vrcp.pop %v1150
  %v1441 = vmul.f32 %v1150, %v1440
  %v1442 = vsub.f32 1.0, %v1441
  %v1443 = vmul.f32 %v1440, %v1442
  %v1444 = vadd.f32 %v1440, %v1443
  %vm1445 = vweird.f32 %v1150
  %vm1446 = vweird.f32 %v1440
  %vm1447 = vmor %vm1445, %vm1446
  %v1448 = vsel %vm1447, %v1440, %v1444
  %v1449 = vand.u32 2147483647, %v1150
  %vm1450 = vcmp.eq.f32.partialorder %v1449, 8.507059e+37
  %v1451 = vand.u32 %v1150, 2147483648
  %v1452 = vor.u32 1.1754944e-38, %v1451
  %v1453 = vsel %vm1450, %v1452, %v1448
  %v1454 = vmul.f32 %v436, %v1453
  %v1455 = vrcp.pop %v1151
  %v1456 = vmul.f32 %v1151, %v1455
  %v1457 = vsub.f32 1.0, %v1456
  %v1458 = vmul.f32 %v1455, %v1457
  %v1459 = vadd.f32 %v1455, %v1458
  %vm1460 = vweird.f32 %v1151
  %vm1461 = vweird.f32 %v1455
  %vm1462 = vmor %vm1460, %vm1461
  %v1463 = vsel %vm1462, %v1455, %v1459
  %v1464 = vand.u32 2147483647, %v1151
  %vm1465 = vcmp.eq.f32.partialorder %v1464, 8.507059e+37
  %v1466 = vand.u32 %v1151, 2147483648
  %v1467 = vor.u32 1.1754944e-38, %v1466
  %v1468 = vsel %vm1465, %v1467, %v1463
  %v1469 = vmul.f32 %v449, %v1468
  %v1470 = vrcp.pop %v1152
  %v1471 = vmul.f32 %v1152, %v1470
  %v1472 = vsub.f32 1.0, %v1471
  %v1473 = vmul.f32 %v1470, %v1472
  %v1474 = vadd.f32 %v1470, %v1473
  %vm1475 = vweird.f32 %v1152
  %vm1476 = vweird.f32 %v1470
  %vm1477 = vmor %vm1475, %vm1476
  %v1478 = vsel %vm1477, %v1470, %v1474
  %v1479 = vand.u32 2147483647, %v1152
  %vm1480 = vcmp.eq.f32.partialorder %v1479, 8.507059e+37
  %v1481 = vand.u32 %v1152, 2147483648
  %v1482 = vor.u32 1.1754944e-38, %v1481
  %v1483 = vsel %vm1480, %v1482, %v1478
  %v1484 = vmul.f32 %v462, %v1483
  %v1485 = vrcp.pop %v1153
  %v1486 = vmul.f32 %v1153, %v1485
  %v1487 = vsub.f32 1.0, %v1486
  %v1488 = vmul.f32 %v1485, %v1487
  %v1489 = vadd.f32 %v1485, %v1488
  %vm1490 = vweird.f32 %v1153
  %vm1491 = vweird.f32 %v1485
  %vm1492 = vmor %vm1490, %vm1491
  %v1493 = vsel %vm1492, %v1485, %v1489
  %v1494 = vand.u32 2147483647, %v1153
  %vm1495 = vcmp.eq.f32.partialorder %v1494, 8.507059e+37
  %v1496 = vand.u32 %v1153, 2147483648
  %v1497 = vor.u32 1.1754944e-38, %v1496
  %v1498 = vsel %vm1495, %v1497, %v1493
  %v1499 = vmul.f32 %v475, %v1498
  %v1500 = vrcp.pop %v1119
  %v1501 = vmul.f32 %v1119, %v1500
  %v1502 = vsub.f32 1.0, %v1501
  %v1503 = vmul.f32 %v1500, %v1502
  %v1504 = vadd.f32 %v1500, %v1503
  %vm1505 = vweird.f32 %v1119
  %vm1506 = vweird.f32 %v1500
  %vm1507 = vmor %vm1505, %vm1506
  %v1508 = vsel %vm1507, %v1500, %v1504
  %v1509 = vand.u32 2147483647, %v1119
  %vm1510 = vcmp.eq.f32.partialorder %v1509, 8.507059e+37
  %v1511 = vand.u32 %v1119, 2147483648
  %v1512 = vor.u32 1.1754944e-38, %v1511
  %v1513 = vsel %vm1510, %v1512, %v1508
  %v1514 = vmul.f32 %v488, %v1513
  %v1515 = vrcp.pop %v1154
  %v1516 = vmul.f32 %v1154, %v1515
  %v1517 = vsub.f32 1.0, %v1516
  %v1518 = vmul.f32 %v1515, %v1517
  %v1519 = vadd.f32 %v1515, %v1518
  %vm1520 = vweird.f32 %v1154
  %vm1521 = vweird.f32 %v1515
  %vm1522 = vmor %vm1520, %vm1521
  %v1523 = vsel %vm1522, %v1515, %v1519
  %v1524 = vand.u32 2147483647, %v1154
  %vm1525 = vcmp.eq.f32.partialorder %v1524, 8.507059e+37
  %v1526 = vand.u32 %v1154, 2147483648
  %v1527 = vor.u32 1.1754944e-38, %v1526
  %v1528 = vsel %vm1525, %v1527, %v1523
  %v1529 = vmul.f32 %v501, %v1528
  %v1530 = vrcp.pop %v1155
  %v1531 = vmul.f32 %v1155, %v1530
  %v1532 = vsub.f32 1.0, %v1531
  %v1533 = vmul.f32 %v1530, %v1532
  %v1534 = vadd.f32 %v1530, %v1533
  %vm1535 = vweird.f32 %v1155
  %vm1536 = vweird.f32 %v1530
  %vm1537 = vmor %vm1535, %vm1536
  %v1538 = vsel %vm1537, %v1530, %v1534
  %v1539 = vand.u32 2147483647, %v1155
  %vm1540 = vcmp.eq.f32.partialorder %v1539, 8.507059e+37
  %v1541 = vand.u32 %v1155, 2147483648
  %v1542 = vor.u32 1.1754944e-38, %v1541
  %v1543 = vsel %vm1540, %v1542, %v1538
  %v1544 = vmul.f32 %v514, %v1543
  %v1545 = vrcp.pop %v1156
  %v1546 = vmul.f32 %v1156, %v1545
  %v1547 = vsub.f32 1.0, %v1546
  %v1548 = vmul.f32 %v1545, %v1547
  %v1549 = vadd.f32 %v1545, %v1548
  %vm1550 = vweird.f32 %v1156
  %vm1551 = vweird.f32 %v1545
  %vm1552 = vmor %vm1550, %vm1551
  %v1553 = vsel %vm1552, %v1545, %v1549
  %v1554 = vand.u32 2147483647, %v1156
  %vm1555 = vcmp.eq.f32.partialorder %v1554, 8.507059e+37
  %v1556 = vand.u32 %v1156, 2147483648
  %v1557 = vor.u32 1.1754944e-38, %v1556
  %v1558 = vsel %vm1555, %v1557, %v1553
  %v1559 = vmul.f32 %v527, %v1558
  %v1560 = vrcp.pop %v1157
  %v1561 = vmul.f32 %v1157, %v1560
  %v1562 = vsub.f32 1.0, %v1561
  %v1563 = vmul.f32 %v1560, %v1562
  %v1564 = vadd.f32 %v1560, %v1563
  %vm1565 = vweird.f32 %v1157
  %vm1566 = vweird.f32 %v1560
  %vm1567 = vmor %vm1565, %vm1566
  %v1568 = vsel %vm1567, %v1560, %v1564
  %v1569 = vand.u32 2147483647, %v1157
  %vm1570 = vcmp.eq.f32.partialorder %v1569, 8.507059e+37
  %v1571 = vand.u32 %v1157, 2147483648
  %v1572 = vor.u32 1.1754944e-38, %v1571
  %v1573 = vsel %vm1570, %v1572, %v1568
  %v1574 = vmul.f32 %v540, %v1573
  %v1575 = vrcp.pop %v1158
  %v1576 = vmul.f32 %v1158, %v1575
  %v1577 = vsub.f32 1.0, %v1576
  %v1578 = vmul.f32 %v1575, %v1577
  %v1579 = vadd.f32 %v1575, %v1578
  %vm1580 = vweird.f32 %v1158
  %vm1581 = vweird.f32 %v1575
  %vm1582 = vmor %vm1580, %vm1581
  %v1583 = vsel %vm1582, %v1575, %v1579
  %v1584 = vand.u32 2147483647, %v1158
  %vm1585 = vcmp.eq.f32.partialorder %v1584, 8.507059e+37
  %v1586 = vand.u32 %v1158, 2147483648
  %v1587 = vor.u32 1.1754944e-38, %v1586
  %v1588 = vsel %vm1585, %v1587, %v1583
  %v1589 = vmul.f32 %v553, %v1588
  %v1590 = vrcp.pop %v1159
  %v1591 = vmul.f32 %v1159, %v1590
  %v1592 = vsub.f32 1.0, %v1591
  %v1593 = vmul.f32 %v1590, %v1592
  %v1594 = vadd.f32 %v1590, %v1593
  %vm1595 = vweird.f32 %v1159
  %vm1596 = vweird.f32 %v1590
  %vm1597 = vmor %vm1595, %vm1596
  %v1598 = vsel %vm1597, %v1590, %v1594
  %v1599 = vand.u32 2147483647, %v1159
  %vm1600 = vcmp.eq.f32.partialorder %v1599, 8.507059e+37
  %v1601 = vand.u32 %v1159, 2147483648
  %v1602 = vor.u32 1.1754944e-38, %v1601
  %v1603 = vsel %vm1600, %v1602, %v1598
  %v1604 = vmul.f32 %v566, %v1603
  %v1605 = vrcp.pop %v1160
  %v1606 = vmul.f32 %v1160, %v1605
  %v1607 = vsub.f32 1.0, %v1606
  %v1608 = vmul.f32 %v1605, %v1607
  %v1609 = vadd.f32 %v1605, %v1608
  %vm1610 = vweird.f32 %v1160
  %vm1611 = vweird.f32 %v1605
  %vm1612 = vmor %vm1610, %vm1611
  %v1613 = vsel %vm1612, %v1605, %v1609
  %v1614 = vand.u32 2147483647, %v1160
  %vm1615 = vcmp.eq.f32.partialorder %v1614, 8.507059e+37
  %v1616 = vand.u32 %v1160, 2147483648
  %v1617 = vor.u32 1.1754944e-38, %v1616
  %v1618 = vsel %vm1615, %v1617, %v1613
  %v1619 = vmul.f32 %v579, %v1618
  %v1620 = vrcp.pop %v1123
  %v1621 = vmul.f32 %v1123, %v1620
  %v1622 = vsub.f32 1.0, %v1621
  %v1623 = vmul.f32 %v1620, %v1622
  %v1624 = vadd.f32 %v1620, %v1623
  %vm1625 = vweird.f32 %v1123
  %vm1626 = vweird.f32 %v1620
  %vm1627 = vmor %vm1625, %vm1626
  %v1628 = vsel %vm1627, %v1620, %v1624
  %v1629 = vand.u32 2147483647, %v1123
  %vm1630 = vcmp.eq.f32.partialorder %v1629, 8.507059e+37
  %v1631 = vand.u32 %v1123, 2147483648
  %v1632 = vor.u32 1.1754944e-38, %v1631
  %v1633 = vsel %vm1630, %v1632, %v1628
  %v1634 = vmul.f32 %v592, %v1633
  %v1635 = vrcp.pop %v1161
  %v1636 = vmul.f32 %v1161, %v1635
  %v1637 = vsub.f32 1.0, %v1636
  %v1638 = vmul.f32 %v1635, %v1637
  %v1639 = vadd.f32 %v1635, %v1638
  %vm1640 = vweird.f32 %v1161
  %vm1641 = vweird.f32 %v1635
  %vm1642 = vmor %vm1640, %vm1641
  %v1643 = vsel %vm1642, %v1635, %v1639
  %v1644 = vand.u32 2147483647, %v1161
  %vm1645 = vcmp.eq.f32.partialorder %v1644, 8.507059e+37
  %v1646 = vand.u32 %v1161, 2147483648
  %v1647 = vor.u32 1.1754944e-38, %v1646
  %v1648 = vsel %vm1645, %v1647, %v1643
  %v1649 = vmul.f32 %v605, %v1648
  %v1650 = vrcp.pop %v1162
  %v1651 = vmul.f32 %v1162, %v1650
  %v1652 = vsub.f32 1.0, %v1651
  %v1653 = vmul.f32 %v1650, %v1652
  %v1654 = vadd.f32 %v1650, %v1653
  %vm1655 = vweird.f32 %v1162
  %vm1656 = vweird.f32 %v1650
  %vm1657 = vmor %vm1655, %vm1656
  %v1658 = vsel %vm1657, %v1650, %v1654
  %v1659 = vand.u32 2147483647, %v1162
  %vm1660 = vcmp.eq.f32.partialorder %v1659, 8.507059e+37
  %v1661 = vand.u32 %v1162, 2147483648
  %v1662 = vor.u32 1.1754944e-38, %v1661
  %v1663 = vsel %vm1660, %v1662, %v1658
  %v1664 = vmul.f32 %v618, %v1663
  %v1665 = vrcp.pop %v1163
  %v1666 = vmul.f32 %v1163, %v1665
  %v1667 = vsub.f32 1.0, %v1666
  %v1668 = vmul.f32 %v1665, %v1667
  %v1669 = vadd.f32 %v1665, %v1668
  %vm1670 = vweird.f32 %v1163
  %vm1671 = vweird.f32 %v1665
  %vm1672 = vmor %vm1670, %vm1671
  %v1673 = vsel %vm1672, %v1665, %v1669
  %v1674 = vand.u32 2147483647, %v1163
  %vm1675 = vcmp.eq.f32.partialorder %v1674, 8.507059e+37
  %v1676 = vand.u32 %v1163, 2147483648
  %v1677 = vor.u32 1.1754944e-38, %v1676
  %v1678 = vsel %vm1675, %v1677, %v1673
  %v1679 = vmul.f32 %v631, %v1678
  %v1680 = vrcp.pop %v1164
  %v1681 = vmul.f32 %v1164, %v1680
  %v1682 = vsub.f32 1.0, %v1681
  %v1683 = vmul.f32 %v1680, %v1682
  %v1684 = vadd.f32 %v1680, %v1683
  %vm1685 = vweird.f32 %v1164
  %vm1686 = vweird.f32 %v1680
  %vm1687 = vmor %vm1685, %vm1686
  %v1688 = vsel %vm1687, %v1680, %v1684
  %v1689 = vand.u32 2147483647, %v1164
  %vm1690 = vcmp.eq.f32.partialorder %v1689, 8.507059e+37
  %v1691 = vand.u32 %v1164, 2147483648
  %v1692 = vor.u32 1.1754944e-38, %v1691
  %v1693 = vsel %vm1690, %v1692, %v1688
  %v1694 = vmul.f32 %v644, %v1693
  %v1695 = vrcp.pop %v1165
  %v1696 = vmul.f32 %v1165, %v1695
  %v1697 = vsub.f32 1.0, %v1696
  %v1698 = vmul.f32 %v1695, %v1697
  %v1699 = vadd.f32 %v1695, %v1698
  %vm1700 = vweird.f32 %v1165
  %vm1701 = vweird.f32 %v1695
  %vm1702 = vmor %vm1700, %vm1701
  %v1703 = vsel %vm1702, %v1695, %v1699
  %v1704 = vand.u32 2147483647, %v1165
  %vm1705 = vcmp.eq.f32.partialorder %v1704, 8.507059e+37
  %v1706 = vand.u32 %v1165, 2147483648
  %v1707 = vor.u32 1.1754944e-38, %v1706
  %v1708 = vsel %vm1705, %v1707, %v1703
  %v1709 = vmul.f32 %v657, %v1708
  %v1710 = vrcp.pop %v1166
  %v1711 = vmul.f32 %v1166, %v1710
  %v1712 = vsub.f32 1.0, %v1711
  %v1713 = vmul.f32 %v1710, %v1712
  %v1714 = vadd.f32 %v1710, %v1713
  %vm1715 = vweird.f32 %v1166
  %vm1716 = vweird.f32 %v1710
  %vm1717 = vmor %vm1715, %vm1716
  %v1718 = vsel %vm1717, %v1710, %v1714
  %v1719 = vand.u32 2147483647, %v1166
  %vm1720 = vcmp.eq.f32.partialorder %v1719, 8.507059e+37
  %v1721 = vand.u32 %v1166, 2147483648
  %v1722 = vor.u32 1.1754944e-38, %v1721
  %v1723 = vsel %vm1720, %v1722, %v1718
  %v1724 = vmul.f32 %v670, %v1723
  %v1725 = vrcp.pop %v1167
  %v1726 = vmul.f32 %v1167, %v1725
  %v1727 = vsub.f32 1.0, %v1726
  %v1728 = vmul.f32 %v1725, %v1727
  %v1729 = vadd.f32 %v1725, %v1728
  %vm1730 = vweird.f32 %v1167
  %vm1731 = vweird.f32 %v1725
  %vm1732 = vmor %vm1730, %vm1731
  %v1733 = vsel %vm1732, %v1725, %v1729
  %v1734 = vand.u32 2147483647, %v1167
  %vm1735 = vcmp.eq.f32.partialorder %v1734, 8.507059e+37
  %v1736 = vand.u32 %v1167, 2147483648
  %v1737 = vor.u32 1.1754944e-38, %v1736
  %v1738 = vsel %vm1735, %v1737, %v1733
  %v1739 = vmul.f32 %v683, %v1738
  %v1740 = vrcp.pop %v1127
  %v1741 = vmul.f32 %v1127, %v1740
  %v1742 = vsub.f32 1.0, %v1741
  %v1743 = vmul.f32 %v1740, %v1742
  %v1744 = vadd.f32 %v1740, %v1743
  %vm1745 = vweird.f32 %v1127
  %vm1746 = vweird.f32 %v1740
  %vm1747 = vmor %vm1745, %vm1746
  %v1748 = vsel %vm1747, %v1740, %v1744
  %v1749 = vand.u32 2147483647, %v1127
  %vm1750 = vcmp.eq.f32.partialorder %v1749, 8.507059e+37
  %v1751 = vand.u32 %v1127, 2147483648
  %v1752 = vor.u32 1.1754944e-38, %v1751
  %v1753 = vsel %vm1750, %v1752, %v1748
  %v1754 = vmul.f32 %v696, %v1753
  %v1755 = vrcp.pop %v1168
  %v1756 = vmul.f32 %v1168, %v1755
  %v1757 = vsub.f32 1.0, %v1756
  %v1758 = vmul.f32 %v1755, %v1757
  %v1759 = vadd.f32 %v1755, %v1758
  %vm1760 = vweird.f32 %v1168
  %vm1761 = vweird.f32 %v1755
  %vm1762 = vmor %vm1760, %vm1761
  %v1763 = vsel %vm1762, %v1755, %v1759
  %v1764 = vand.u32 2147483647, %v1168
  %vm1765 = vcmp.eq.f32.partialorder %v1764, 8.507059e+37
  %v1766 = vand.u32 %v1168, 2147483648
  %v1767 = vor.u32 1.1754944e-38, %v1766
  %v1768 = vsel %vm1765, %v1767, %v1763
  %v1769 = vmul.f32 %v709, %v1768
  %v1770 = vrcp.pop %v1169
  %v1771 = vmul.f32 %v1169, %v1770
  %v1772 = vsub.f32 1.0, %v1771
  %v1773 = vmul.f32 %v1770, %v1772
  %v1774 = vadd.f32 %v1770, %v1773
  %vm1775 = vweird.f32 %v1169
  %vm1776 = vweird.f32 %v1770
  %vm1777 = vmor %vm1775, %vm1776
  %v1778 = vsel %vm1777, %v1770, %v1774
  %v1779 = vand.u32 2147483647, %v1169
  %vm1780 = vcmp.eq.f32.partialorder %v1779, 8.507059e+37
  %v1781 = vand.u32 %v1169, 2147483648
  %v1782 = vor.u32 1.1754944e-38, %v1781
  %v1783 = vsel %vm1780, %v1782, %v1778
  %v1784 = vmul.f32 %v722, %v1783
  %v1785 = vrcp.pop %v1170
  %v1786 = vmul.f32 %v1170, %v1785
  %v1787 = vsub.f32 1.0, %v1786
  %v1788 = vmul.f32 %v1785, %v1787
  %v1789 = vadd.f32 %v1785, %v1788
  %vm1790 = vweird.f32 %v1170
  %vm1791 = vweird.f32 %v1785
  %vm1792 = vmor %vm1790, %vm1791
  %v1793 = vsel %vm1792, %v1785, %v1789
  %v1794 = vand.u32 2147483647, %v1170
  %vm1795 = vcmp.eq.f32.partialorder %v1794, 8.507059e+37
  %v1796 = vand.u32 %v1170, 2147483648
  %v1797 = vor.u32 1.1754944e-38, %v1796
  %v1798 = vsel %vm1795, %v1797, %v1793
  %v1799 = vmul.f32 %v735, %v1798
  %v1800 = vrcp.pop %v1171
  %v1801 = vmul.f32 %v1171, %v1800
  %v1802 = vsub.f32 1.0, %v1801
  %v1803 = vmul.f32 %v1800, %v1802
  %v1804 = vadd.f32 %v1800, %v1803
  %vm1805 = vweird.f32 %v1171
  %vm1806 = vweird.f32 %v1800
  %vm1807 = vmor %vm1805, %vm1806
  %v1808 = vsel %vm1807, %v1800, %v1804
  %v1809 = vand.u32 2147483647, %v1171
  %vm1810 = vcmp.eq.f32.partialorder %v1809, 8.507059e+37
  %v1811 = vand.u32 %v1171, 2147483648
  %v1812 = vor.u32 1.1754944e-38, %v1811
  %v1813 = vsel %vm1810, %v1812, %v1808
  %v1814 = vmul.f32 %v748, %v1813
  %v1815 = vrcp.pop %v1172
  %v1816 = vmul.f32 %v1172, %v1815
  %v1817 = vsub.f32 1.0, %v1816
  %v1818 = vmul.f32 %v1815, %v1817
  %v1819 = vadd.f32 %v1815, %v1818
  %vm1820 = vweird.f32 %v1172
  %vm1821 = vweird.f32 %v1815
  %vm1822 = vmor %vm1820, %vm1821
  %v1823 = vsel %vm1822, %v1815, %v1819
  %v1824 = vand.u32 2147483647, %v1172
  %vm1825 = vcmp.eq.f32.partialorder %v1824, 8.507059e+37
  %v1826 = vand.u32 %v1172, 2147483648
  %v1827 = vor.u32 1.1754944e-38, %v1826
  %v1828 = vsel %vm1825, %v1827, %v1823
  %v1829 = vmul.f32 %v761, %v1828
  %v1830 = vrcp.pop %v1173
  %v1831 = vmul.f32 %v1173, %v1830
  %v1832 = vsub.f32 1.0, %v1831
  %v1833 = vmul.f32 %v1830, %v1832
  %v1834 = vadd.f32 %v1830, %v1833
  %vm1835 = vweird.f32 %v1173
  %vm1836 = vweird.f32 %v1830
  %vm1837 = vmor %vm1835, %vm1836
  %v1838 = vsel %vm1837, %v1830, %v1834
  %v1839 = vand.u32 2147483647, %v1173
  %vm1840 = vcmp.eq.f32.partialorder %v1839, 8.507059e+37
  %v1841 = vand.u32 %v1173, 2147483648
  %v1842 = vor.u32 1.1754944e-38, %v1841
  %v1843 = vsel %vm1840, %v1842, %v1838
  %v1844 = vmul.f32 %v774, %v1843
  %v1845 = vrcp.pop %v1174
  %v1846 = vmul.f32 %v1174, %v1845
  %v1847 = vsub.f32 1.0, %v1846
  %v1848 = vmul.f32 %v1845, %v1847
  %v1849 = vadd.f32 %v1845, %v1848
  %vm1850 = vweird.f32 %v1174
  %vm1851 = vweird.f32 %v1845
  %vm1852 = vmor %vm1850, %vm1851
  %v1853 = vsel %vm1852, %v1845, %v1849
  %v1854 = vand.u32 2147483647, %v1174
  %vm1855 = vcmp.eq.f32.partialorder %v1854, 8.507059e+37
  %v1856 = vand.u32 %v1174, 2147483648
  %v1857 = vor.u32 1.1754944e-38, %v1856
  %v1858 = vsel %vm1855, %v1857, %v1853
  %v1859 = vmul.f32 %v787, %v1858
  %v1860 = vrcp.pop %v1131
  %v1861 = vmul.f32 %v1131, %v1860
  %v1862 = vsub.f32 1.0, %v1861
  %v1863 = vmul.f32 %v1860, %v1862
  %v1864 = vadd.f32 %v1860, %v1863
  %vm1865 = vweird.f32 %v1131
  %vm1866 = vweird.f32 %v1860
  %vm1867 = vmor %vm1865, %vm1866
  %v1868 = vsel %vm1867, %v1860, %v1864
  %v1869 = vand.u32 2147483647, %v1131
  %vm1870 = vcmp.eq.f32.partialorder %v1869, 8.507059e+37
  %v1871 = vand.u32 %v1131, 2147483648
  %v1872 = vor.u32 1.1754944e-38, %v1871
  %v1873 = vsel %vm1870, %v1872, %v1868
  %v1874 = vmul.f32 %v800, %v1873
  %v1875 = vrcp.pop %v1175
  %v1876 = vmul.f32 %v1175, %v1875
  %v1877 = vsub.f32 1.0, %v1876
  %v1878 = vmul.f32 %v1875, %v1877
  %v1879 = vadd.f32 %v1875, %v1878
  %vm1880 = vweird.f32 %v1175
  %vm1881 = vweird.f32 %v1875
  %vm1882 = vmor %vm1880, %vm1881
  %v1883 = vsel %vm1882, %v1875, %v1879
  %v1884 = vand.u32 2147483647, %v1175
  %vm1885 = vcmp.eq.f32.partialorder %v1884, 8.507059e+37
  %v1886 = vand.u32 %v1175, 2147483648
  %v1887 = vor.u32 1.1754944e-38, %v1886
  %v1888 = vsel %vm1885, %v1887, %v1883
  %v1889 = vmul.f32 %v813, %v1888
  %v1890 = vrcp.pop %v1176
  %v1891 = vmul.f32 %v1176, %v1890
  %v1892 = vsub.f32 1.0, %v1891
  %v1893 = vmul.f32 %v1890, %v1892
  %v1894 = vadd.f32 %v1890, %v1893
  %vm1895 = vweird.f32 %v1176
  %vm1896 = vweird.f32 %v1890
  %vm1897 = vmor %vm1895, %vm1896
  %v1898 = vsel %vm1897, %v1890, %v1894
  %v1899 = vand.u32 2147483647, %v1176
  %vm1900 = vcmp.eq.f32.partialorder %v1899, 8.507059e+37
  %v1901 = vand.u32 %v1176, 2147483648
  %v1902 = vor.u32 1.1754944e-38, %v1901
  %v1903 = vsel %vm1900, %v1902, %v1898
  %v1904 = vmul.f32 %v826, %v1903
  %v1905 = vrcp.pop %v1177
  %v1906 = vmul.f32 %v1177, %v1905
  %v1907 = vsub.f32 1.0, %v1906
  %v1908 = vmul.f32 %v1905, %v1907
  %v1909 = vadd.f32 %v1905, %v1908
  %vm1910 = vweird.f32 %v1177
  %vm1911 = vweird.f32 %v1905
  %vm1912 = vmor %vm1910, %vm1911
  %v1913 = vsel %vm1912, %v1905, %v1909
  %v1914 = vand.u32 2147483647, %v1177
  %vm1915 = vcmp.eq.f32.partialorder %v1914, 8.507059e+37
  %v1916 = vand.u32 %v1177, 2147483648
  %v1917 = vor.u32 1.1754944e-38, %v1916
  %v1918 = vsel %vm1915, %v1917, %v1913
  %v1919 = vmul.f32 %v839, %v1918
  %v1920 = vrcp.pop %v1178
  %v1921 = vmul.f32 %v1178, %v1920
  %v1922 = vsub.f32 1.0, %v1921
  %v1923 = vmul.f32 %v1920, %v1922
  %v1924 = vadd.f32 %v1920, %v1923
  %vm1925 = vweird.f32 %v1178
  %vm1926 = vweird.f32 %v1920
  %vm1927 = vmor %vm1925, %vm1926
  %v1928 = vsel %vm1927, %v1920, %v1924
  %v1929 = vand.u32 2147483647, %v1178
  %vm1930 = vcmp.eq.f32.partialorder %v1929, 8.507059e+37
  %v1931 = vand.u32 %v1178, 2147483648
  %v1932 = vor.u32 1.1754944e-38, %v1931
  %v1933 = vsel %vm1930, %v1932, %v1928
  %v1934 = vmul.f32 %v852, %v1933
  %v1935 = vrcp.pop %v1179
  %v1936 = vmul.f32 %v1179, %v1935
  %v1937 = vsub.f32 1.0, %v1936
  %v1938 = vmul.f32 %v1935, %v1937
  %v1939 = vadd.f32 %v1935, %v1938
  %vm1940 = vweird.f32 %v1179
  %vm1941 = vweird.f32 %v1935
  %vm1942 = vmor %vm1940, %vm1941
  %v1943 = vsel %vm1942, %v1935, %v1939
  %v1944 = vand.u32 2147483647, %v1179
  %vm1945 = vcmp.eq.f32.partialorder %v1944, 8.507059e+37
  %v1946 = vand.u32 %v1179, 2147483648
  %v1947 = vor.u32 1.1754944e-38, %v1946
  %v1948 = vsel %vm1945, %v1947, %v1943
  %v1949 = vmul.f32 %v865, %v1948
  %v1950 = vrcp.pop %v1180
  %v1951 = vmul.f32 %v1180, %v1950
  %v1952 = vsub.f32 1.0, %v1951
  %v1953 = vmul.f32 %v1950, %v1952
  %v1954 = vadd.f32 %v1950, %v1953
  %vm1955 = vweird.f32 %v1180
  %vm1956 = vweird.f32 %v1950
  %vm1957 = vmor %vm1955, %vm1956
  %v1958 = vsel %vm1957, %v1950, %v1954
  %v1959 = vand.u32 2147483647, %v1180
  %vm1960 = vcmp.eq.f32.partialorder %v1959, 8.507059e+37
  %v1961 = vand.u32 %v1180, 2147483648
  %v1962 = vor.u32 1.1754944e-38, %v1961
  %v1963 = vsel %vm1960, %v1962, %v1958
  %v1964 = vmul.f32 %v878, %v1963
  %v1965 = vrcp.pop %v1181
  %v1966 = vmul.f32 %v1181, %v1965
  %v1967 = vsub.f32 1.0, %v1966
  %v1968 = vmul.f32 %v1965, %v1967
  %v1969 = vadd.f32 %v1965, %v1968
  %vm1970 = vweird.f32 %v1181
  %vm1971 = vweird.f32 %v1965
  %vm1972 = vmor %vm1970, %vm1971
  %v1973 = vsel %vm1972, %v1965, %v1969
  %v1974 = vand.u32 2147483647, %v1181
  %vm1975 = vcmp.eq.f32.partialorder %v1974, 8.507059e+37
  %v1976 = vand.u32 %v1181, 2147483648
  %v1977 = vor.u32 1.1754944e-38, %v1976
  %v1978 = vsel %vm1975, %v1977, %v1973
  %v1979 = vmul.f32 %v891, %v1978
  %v1980 = vrcp.pop %v1135
  %v1981 = vmul.f32 %v1135, %v1980
  %v1982 = vsub.f32 1.0, %v1981
  %v1983 = vmul.f32 %v1980, %v1982
  %v1984 = vadd.f32 %v1980, %v1983
  %vm1985 = vweird.f32 %v1135
  %vm1986 = vweird.f32 %v1980
  %vm1987 = vmor %vm1985, %vm1986
  %v1988 = vsel %vm1987, %v1980, %v1984
  %v1989 = vand.u32 2147483647, %v1135
  %vm1990 = vcmp.eq.f32.partialorder %v1989, 8.507059e+37
  %v1991 = vand.u32 %v1135, 2147483648
  %v1992 = vor.u32 1.1754944e-38, %v1991
  %v1993 = vsel %vm1990, %v1992, %v1988
  %v1994 = vmul.f32 %v904, %v1993
  %v1995 = vrcp.pop %v1182
  %v1996 = vmul.f32 %v1182, %v1995
  %v1997 = vsub.f32 1.0, %v1996
  %v1998 = vmul.f32 %v1995, %v1997
  %v1999 = vadd.f32 %v1995, %v1998
  %vm2000 = vweird.f32 %v1182
  %vm2001 = vweird.f32 %v1995
  %vm2002 = vmor %vm2000, %vm2001
  %v2003 = vsel %vm2002, %v1995, %v1999
  %v2004 = vand.u32 2147483647, %v1182
  %vm2005 = vcmp.eq.f32.partialorder %v2004, 8.507059e+37
  %v2006 = vand.u32 %v1182, 2147483648
  %v2007 = vor.u32 1.1754944e-38, %v2006
  %v2008 = vsel %vm2005, %v2007, %v2003
  %v2009 = vmul.f32 %v917, %v2008
  %v2010 = vrcp.pop %v1183
  %v2011 = vmul.f32 %v1183, %v2010
  %v2012 = vsub.f32 1.0, %v2011
  %v2013 = vmul.f32 %v2010, %v2012
  %v2014 = vadd.f32 %v2010, %v2013
  %vm2015 = vweird.f32 %v1183
  %vm2016 = vweird.f32 %v2010
  %vm2017 = vmor %vm2015, %vm2016
  %v2018 = vsel %vm2017, %v2010, %v2014
  %v2019 = vand.u32 2147483647, %v1183
  %vm2020 = vcmp.eq.f32.partialorder %v2019, 8.507059e+37
  %v2021 = vand.u32 %v1183, 2147483648
  %v2022 = vor.u32 1.1754944e-38, %v2021
  %v2023 = vsel %vm2020, %v2022, %v2018
  %v2024 = vmul.f32 %v930, %v2023
  %v2025 = vrcp.pop %v1184
  %v2026 = vmul.f32 %v1184, %v2025
  %v2027 = vsub.f32 1.0, %v2026
  %v2028 = vmul.f32 %v2025, %v2027
  %v2029 = vadd.f32 %v2025, %v2028
  %vm2030 = vweird.f32 %v1184
  %vm2031 = vweird.f32 %v2025
  %vm2032 = vmor %vm2030, %vm2031
  %v2033 = vsel %vm2032, %v2025, %v2029
  %v2034 = vand.u32 2147483647, %v1184
  %vm2035 = vcmp.eq.f32.partialorder %v2034, 8.507059e+37
  %v2036 = vand.u32 %v1184, 2147483648
  %v2037 = vor.u32 1.1754944e-38, %v2036
  %v2038 = vsel %vm2035, %v2037, %v2033
  %v2039 = vmul.f32 %v943, %v2038
  %v2040 = vrcp.pop %v1185
  %v2041 = vmul.f32 %v1185, %v2040
  %v2042 = vsub.f32 1.0, %v2041
  %v2043 = vmul.f32 %v2040, %v2042
  %v2044 = vadd.f32 %v2040, %v2043
  %vm2045 = vweird.f32 %v1185
  %vm2046 = vweird.f32 %v2040
  %vm2047 = vmor %vm2045, %vm2046
  %v2048 = vsel %vm2047, %v2040, %v2044
  %v2049 = vand.u32 2147483647, %v1185
  %vm2050 = vcmp.eq.f32.partialorder %v2049, 8.507059e+37
  %v2051 = vand.u32 %v1185, 2147483648
  %v2052 = vor.u32 1.1754944e-38, %v2051
  %v2053 = vsel %vm2050, %v2052, %v2048
  %v2054 = vmul.f32 %v956, %v2053
  %v2055 = vrcp.pop %v1186
  %v2056 = vmul.f32 %v1186, %v2055
  %v2057 = vsub.f32 1.0, %v2056
  %v2058 = vmul.f32 %v2055, %v2057
  %v2059 = vadd.f32 %v2055, %v2058
  %vm2060 = vweird.f32 %v1186
  %vm2061 = vweird.f32 %v2055
  %vm2062 = vmor %vm2060, %vm2061
  %v2063 = vsel %vm2062, %v2055, %v2059
  %v2064 = vand.u32 2147483647, %v1186
  %vm2065 = vcmp.eq.f32.partialorder %v2064, 8.507059e+37
  %v2066 = vand.u32 %v1186, 2147483648
  %v2067 = vor.u32 1.1754944e-38, %v2066
  %v2068 = vsel %vm2065, %v2067, %v2063
  %v2069 = vmul.f32 %v969, %v2068
  %v2070 = vrcp.pop %v1187
  %v2071 = vmul.f32 %v1187, %v2070
  %v2072 = vsub.f32 1.0, %v2071
  %v2073 = vmul.f32 %v2070, %v2072
  %v2074 = vadd.f32 %v2070, %v2073
  %vm2075 = vweird.f32 %v1187
  %vm2076 = vweird.f32 %v2070
  %vm2077 = vmor %vm2075, %vm2076
  %v2078 = vsel %vm2077, %v2070, %v2074
  %v2079 = vand.u32 2147483647, %v1187
  %vm2080 = vcmp.eq.f32.partialorder %v2079, 8.507059e+37
  %v2081 = vand.u32 %v1187, 2147483648
  %v2082 = vor.u32 1.1754944e-38, %v2081
  %v2083 = vsel %vm2080, %v2082, %v2078
  %v2084 = vmul.f32 %v982, %v2083
  %v2085 = vrcp.pop %v1188
  %v2086 = vmul.f32 %v1188, %v2085
  %v2087 = vsub.f32 1.0, %v2086
  %v2088 = vmul.f32 %v2085, %v2087
  %v2089 = vadd.f32 %v2085, %v2088
  %vm2090 = vweird.f32 %v1188
  %vm2091 = vweird.f32 %v2085
  %vm2092 = vmor %vm2090, %vm2091
  %v2093 = vsel %vm2092, %v2085, %v2089
  %v2094 = vand.u32 2147483647, %v1188
  %vm2095 = vcmp.eq.f32.partialorder %v2094, 8.507059e+37
  %v2096 = vand.u32 %v1188, 2147483648
  %v2097 = vor.u32 1.1754944e-38, %v2096
  %v2098 = vsel %vm2095, %v2097, %v2093
  %v2099 = vmul.f32 %v995, %v2098
  %v2100 = vrcp.pop %v1139
  %v2101 = vmul.f32 %v1139, %v2100
  %v2102 = vsub.f32 1.0, %v2101
  %v2103 = vmul.f32 %v2100, %v2102
  %v2104 = vadd.f32 %v2100, %v2103
  %vm2105 = vweird.f32 %v1139
  %vm2106 = vweird.f32 %v2100
  %vm2107 = vmor %vm2105, %vm2106
  %v2108 = vsel %vm2107, %v2100, %v2104
  %v2109 = vand.u32 2147483647, %v1139
  %vm2110 = vcmp.eq.f32.partialorder %v2109, 8.507059e+37
  %v2111 = vand.u32 %v1139, 2147483648
  %v2112 = vor.u32 1.1754944e-38, %v2111
  %v2113 = vsel %vm2110, %v2112, %v2108
  %v2114 = vmul.f32 %v1008, %v2113
  %v2115 = vrcp.pop %v1189
  %v2116 = vmul.f32 %v1189, %v2115
  %v2117 = vsub.f32 1.0, %v2116
  %v2118 = vmul.f32 %v2115, %v2117
  %v2119 = vadd.f32 %v2115, %v2118
  %vm2120 = vweird.f32 %v1189
  %vm2121 = vweird.f32 %v2115
  %vm2122 = vmor %vm2120, %vm2121
  %v2123 = vsel %vm2122, %v2115, %v2119
  %v2124 = vand.u32 2147483647, %v1189
  %vm2125 = vcmp.eq.f32.partialorder %v2124, 8.507059e+37
  %v2126 = vand.u32 %v1189, 2147483648
  %v2127 = vor.u32 1.1754944e-38, %v2126
  %v2128 = vsel %vm2125, %v2127, %v2123
  %v2129 = vmul.f32 %v1021, %v2128
  %v2130 = vrcp.pop %v1190
  %v2131 = vmul.f32 %v1190, %v2130
  %v2132 = vsub.f32 1.0, %v2131
  %v2133 = vmul.f32 %v2130, %v2132
  %v2134 = vadd.f32 %v2130, %v2133
  %vm2135 = vweird.f32 %v1190
  %vm2136 = vweird.f32 %v2130
  %vm2137 = vmor %vm2135, %vm2136
  %v2138 = vsel %vm2137, %v2130, %v2134
  %v2139 = vand.u32 2147483647, %v1190
  %vm2140 = vcmp.eq.f32.partialorder %v2139, 8.507059e+37
  %v2141 = vand.u32 %v1190, 2147483648
  %v2142 = vor.u32 1.1754944e-38, %v2141
  %v2143 = vsel %vm2140, %v2142, %v2138
  %v2144 = vmul.f32 %v1034, %v2143
  %v2145 = vrcp.pop %v1191
  %v2146 = vmul.f32 %v1191, %v2145
  %v2147 = vsub.f32 1.0, %v2146
  %v2148 = vmul.f32 %v2145, %v2147
  %v2149 = vadd.f32 %v2145, %v2148
  %vm2150 = vweird.f32 %v1191
  %vm2151 = vweird.f32 %v2145
  %vm2152 = vmor %vm2150, %vm2151
  %v2153 = vsel %vm2152, %v2145, %v2149
  %v2154 = vand.u32 2147483647, %v1191
  %vm2155 = vcmp.eq.f32.partialorder %v2154, 8.507059e+37
  %v2156 = vand.u32 %v1191, 2147483648
  %v2157 = vor.u32 1.1754944e-38, %v2156
  %v2158 = vsel %vm2155, %v2157, %v2153
  %v2159 = vmul.f32 %v1047, %v2158
  %v2160 = vrcp.pop %v1192
  %v2161 = vmul.f32 %v1192, %v2160
  %v2162 = vsub.f32 1.0, %v2161
  %v2163 = vmul.f32 %v2160, %v2162
  %v2164 = vadd.f32 %v2160, %v2163
  %vm2165 = vweird.f32 %v1192
  %vm2166 = vweird.f32 %v2160
  %vm2167 = vmor %vm2165, %vm2166
  %v2168 = vsel %vm2167, %v2160, %v2164
  %v2169 = vand.u32 2147483647, %v1192
  %vm2170 = vcmp.eq.f32.partialorder %v2169, 8.507059e+37
  %v2171 = vand.u32 %v1192, 2147483648
  %v2172 = vor.u32 1.1754944e-38, %v2171
  %v2173 = vsel %vm2170, %v2172, %v2168
  %v2174 = vmul.f32 %v1060, %v2173
  %v2175 = vrcp.pop %v1193
  %v2176 = vmul.f32 %v1193, %v2175
  %v2177 = vsub.f32 1.0, %v2176
  %v2178 = vmul.f32 %v2175, %v2177
  %v2179 = vadd.f32 %v2175, %v2178
  %vm2180 = vweird.f32 %v1193
  %vm2181 = vweird.f32 %v2175
  %vm2182 = vmor %vm2180, %vm2181
  %v2183 = vsel %vm2182, %v2175, %v2179
  %v2184 = vand.u32 2147483647, %v1193
  %vm2185 = vcmp.eq.f32.partialorder %v2184, 8.507059e+37
  %v2186 = vand.u32 %v1193, 2147483648
  %v2187 = vor.u32 1.1754944e-38, %v2186
  %v2188 = vsel %vm2185, %v2187, %v2183
  %v2189 = vmul.f32 %v1073, %v2188
  %v2190 = vrcp.pop %v1194
  %v2191 = vmul.f32 %v1194, %v2190
  %v2192 = vsub.f32 1.0, %v2191
  %v2193 = vmul.f32 %v2190, %v2192
  %v2194 = vadd.f32 %v2190, %v2193
  %vm2195 = vweird.f32 %v1194
  %vm2196 = vweird.f32 %v2190
  %vm2197 = vmor %vm2195, %vm2196
  %v2198 = vsel %vm2197, %v2190, %v2194
  %v2199 = vand.u32 2147483647, %v1194
  %vm2200 = vcmp.eq.f32.partialorder %v2199, 8.507059e+37
  %v2201 = vand.u32 %v1194, 2147483648
  %v2202 = vor.u32 1.1754944e-38, %v2201
  %v2203 = vsel %vm2200, %v2202, %v2198
  %v2204 = vmul.f32 %v1086, %v2203
  %v2205 = vrcp.pop %v1195
  %v2206 = vmul.f32 %v1195, %v2205
  %v2207 = vsub.f32 1.0, %v2206
  %v2208 = vmul.f32 %v2205, %v2207
  %v2209 = vadd.f32 %v2205, %v2208
  %vm2210 = vweird.f32 %v1195
  %vm2211 = vweird.f32 %v2205
  %vm2212 = vmor %vm2210, %vm2211
  %v2213 = vsel %vm2212, %v2205, %v2209
  %v2214 = vand.u32 2147483647, %v1195
  %vm2215 = vcmp.eq.f32.partialorder %v2214, 8.507059e+37
  %v2216 = vand.u32 %v1195, 2147483648
  %v2217 = vor.u32 1.1754944e-38, %v2216
  %v2218 = vsel %vm2215, %v2217, %v2213
  %v2219 = vmul.f32 %v1099, %v2218
  %v2284 = vrot.slane %v1289, 7
  %vm2285 = vcmask 1041409
  %v2286 = vsel %vm2285, %v2284, %v1274
  %v2287 = vrot.slane %v1304, 6
  %vm2288 = vcmask 1042434
  %v2289 = vsel %vm2288, %v2287, %v2286
  %v2290 = vrot.slane %v1319, 5
  %vm2291 = vcmask 1043459
  %v2292 = vsel %vm2291, %v2290, %v2289
  %v2293 = vrot.slane %v1334, 4
  %vm2294 = vcmask 1044484
  %v2295 = vsel %vm2294, %v2293, %v2292
  %v2296 = vrot.slane %v1349, 3
  %vm2297 = vcmask 1045509
  %v2298 = vsel %vm2297, %v2296, %v2295
  %v2299 = vrot.slane %v1364, 2
  %vm2300 = vcmask 1046534
  %v2301 = vsel %vm2300, %v2299, %v2298
  %v2302 = vrot.slane %v1379, 1
  %vm2303 = vcmask 1047559
  %v2304 = vsel %vm2303, %v2302, %v2301
  %v2305 = vrot.slane %v1409, 7
  %v2306 = vsel %vm2285, %v2305, %v1394
  %v2307 = vrot.slane %v1424, 6
  %v2308 = vsel %vm2288, %v2307, %v2306
  %v2309 = vrot.slane %v1439, 5
  %v2310 = vsel %vm2291, %v2309, %v2308
  %v2311 = vrot.slane %v1454, 4
  %v2312 = vsel %vm2294, %v2311, %v2310
  %v2313 = vrot.slane %v1469, 3
  %v2314 = vsel %vm2297, %v2313, %v2312
  %v2315 = vrot.slane %v1484, 2
  %v2316 = vsel %vm2300, %v2315, %v2314
  %v2317 = vrot.slane %v1499, 1
  %v2318 = vsel %vm2303, %v2317, %v2316
  %v2319 = vrot.slane %v1529, 7
  %v2320 = vsel %vm2285, %v2319, %v1514
  %v2321 = vrot.slane %v1544, 6
  %v2322 = vsel %vm2288, %v2321, %v2320
  %v2323 = vrot.slane %v1559, 5
  %v2324 = vsel %vm2291, %v2323, %v2322
  %v2325 = vrot.slane %v1574, 4
  %v2326 = vsel %vm2294, %v2325, %v2324
  %v2327 = vrot.slane %v1589, 3
  %v2328 = vsel %vm2297, %v2327, %v2326
  %v2329 = vrot.slane %v1604, 2
  %v2330 = vsel %vm2300, %v2329, %v2328
  %v2331 = vrot.slane %v1619, 1
  %v2332 = vsel %vm2303, %v2331, %v2330
  %v2333 = vrot.slane %v1649, 7
  %v2334 = vsel %vm2285, %v2333, %v1634
  %v2335 = vrot.slane %v1664, 6
  %v2336 = vsel %vm2288, %v2335, %v2334
  %v2337 = vrot.slane %v1679, 5
  %v2338 = vsel %vm2291, %v2337, %v2336
  %v2339 = vrot.slane %v1694, 4
  %v2340 = vsel %vm2294, %v2339, %v2338
  %v2341 = vrot.slane %v1709, 3
  %v2342 = vsel %vm2297, %v2341, %v2340
  %v2343 = vrot.slane %v1724, 2
  %v2344 = vsel %vm2300, %v2343, %v2342
  %v2345 = vrot.slane %v1739, 1
  %v2346 = vsel %vm2303, %v2345, %v2344
  %v2347 = vrot.slane %v1769, 7
  %v2348 = vsel %vm2285, %v2347, %v1754
  %v2349 = vrot.slane %v1784, 6
  %v2350 = vsel %vm2288, %v2349, %v2348
  %v2351 = vrot.slane %v1799, 5
  %v2352 = vsel %vm2291, %v2351, %v2350
  %v2353 = vrot.slane %v1814, 4
  %v2354 = vsel %vm2294, %v2353, %v2352
  %v2355 = vrot.slane %v1829, 3
  %v2356 = vsel %vm2297, %v2355, %v2354
  %v2357 = vrot.slane %v1844, 2
  %v2358 = vsel %vm2300, %v2357, %v2356
  %v2359 = vrot.slane %v1859, 1
  %v2360 = vsel %vm2303, %v2359, %v2358
  %v2361 = vrot.slane %v1889, 7
  %v2362 = vsel %vm2285, %v2361, %v1874
  %v2363 = vrot.slane %v1904, 6
  %v2364 = vsel %vm2288, %v2363, %v2362
  %v2365 = vrot.slane %v1919, 5
  %v2366 = vsel %vm2291, %v2365, %v2364
  %v2367 = vrot.slane %v1934, 4
  %v2368 = vsel %vm2294, %v2367, %v2366
  %v2369 = vrot.slane %v1949, 3
  %v2370 = vsel %vm2297, %v2369, %v2368
  %v2371 = vrot.slane %v1964, 2
  %v2372 = vsel %vm2300, %v2371, %v2370
  %v2373 = vrot.slane %v1979, 1
  %v2374 = vsel %vm2303, %v2373, %v2372
  %v2375 = vrot.slane %v2009, 7
  %v2376 = vsel %vm2285, %v2375, %v1994
  %v2377 = vrot.slane %v2024, 6
  %v2378 = vsel %vm2288, %v2377, %v2376
  %v2379 = vrot.slane %v2039, 5
  %v2380 = vsel %vm2291, %v2379, %v2378
  %v2381 = vrot.slane %v2054, 4
  %v2382 = vsel %vm2294, %v2381, %v2380
  %v2383 = vrot.slane %v2069, 3
  %v2384 = vsel %vm2297, %v2383, %v2382
  %v2385 = vrot.slane %v2084, 2
  %v2386 = vsel %vm2300, %v2385, %v2384
  %v2387 = vrot.slane %v2099, 1
  %v2388 = vsel %vm2303, %v2387, %v2386
  %v2389 = vrot.slane %v2129, 7
  %v2390 = vsel %vm2285, %v2389, %v2114
  %v2391 = vrot.slane %v2144, 6
  %v2392 = vsel %vm2288, %v2391, %v2390
  %v2393 = vrot.slane %v2159, 5
  %v2394 = vsel %vm2291, %v2393, %v2392
  %v2395 = vrot.slane %v2174, 4
  %v2396 = vsel %vm2294, %v2395, %v2394
  %v2397 = vrot.slane %v2189, 3
  %v2398 = vsel %vm2297, %v2397, %v2396
  %v2399 = vrot.slane %v2204, 2
  %v2400 = vsel %vm2300, %v2399, %v2398
  %v2401 = vrot.slane %v2219, 1
  %v2402 = vsel %vm2303, %v2401, %v2400
  %2411 = vst.msk [vmem:[%s2] sm:$0xff] %vm267, %v2304
  %2412 = vst.msk [vmem:[%s2 + $0x8] sm:$0xff] %vm267, %v2318
  %2413 = vst.msk [vmem:[%s2 + $0x10] sm:$0xff] %vm267, %v2332
  %2414 = vst.msk [vmem:[%s2 + $0x18] sm:$0xff] %vm267, %v2346
  %2415 = vst.msk [vmem:[%s2 + $0x20] sm:$0xff] %vm267, %v2360
  %2416 = vst.msk [vmem:[%s2 + $0x28] sm:$0xff] %vm267, %v2374
  %2417 = vst.msk [vmem:[%s2 + $0x30] sm:$0xff] %vm267, %v2388
  %2418 = vst.msk [vmem:[%s2 + $0x38] sm:$0xff] %vm267, %v2402
  // Predicated region
  $region10: #{tpu_custom_call.1} parent=0 // pred_check
    _
  $region11: #{tpu_custom_call.1} parent=0 // pred_check_branch
    %2420 = sbr.rel (0) target = $region13
  $region12: #{tpu_custom_call.1} parent=0 // pred_region
    _
  $region13: #{tpu_custom_call.1} parent=0 // pred_fallthru
    _
  // Predicated region
  $region14: #{tpu_custom_call.1} parent=0 // pred_check
    _
  $region15: #{tpu_custom_call.1} parent=0 // pred_check_branch
    %2422 = sbr.rel (0) target = $region17
  $region16: #{tpu_custom_call.1} parent=0 // pred_region
    _
  $region17: #{tpu_custom_call.1} parent=0 // pred_fallthru
    _

</llo_original>
